<compile_context>
chip_gen: v7x
topology: tpu7x:2x2x1
jax: 0.10.0
libtpu: 0.0.40
codegen_flags: <defaults>
</compile_context>

<pallas_src>
import jax
import jax.numpy as jnp
from jax.experimental import pallas as pl
from jax.experimental.pallas import tpu as pltpu


def _round_up(x, m):
    return (x + m - 1) // m * m


def _cdiv(a, b):
    return -(-a // b)


def _lane_multiple():
    """MXU-friendly lane padding: 256 on v6e/v7x (2x256x256 MXU), else 128."""
    try:
        kind = jax.devices()[0].device_kind.lower()
    except Exception:
        return 128
    return 256 if any(s in kind for s in ("v6", "v7", "7x")) else 128


def _vmem_cap_bytes():
    """Physical VMEM per core minus headroom for compiler scratch / semaphores."""
    cap = 64 * 1024 * 1024
    try:
        info = pltpu.get_tpu_info()
        cap = int(getattr(info, "vmem_capacity_bytes", cap))
    except Exception:
        pass
    return (cap // 8) * 7


# ---------------------------------------------------------------------------
# Kernel
# ---------------------------------------------------------------------------
def gru_seq_kernel(x_ref, h0_ref, wxr_ref, whr_ref, wxuc_ref, whu_ref, whc_ref,
                   br_ref, buc_ref, o_ref, h_ref):
    """One (batch-tile, time-step) grid point of the GRU.

    x_ref   : [tb, Dp]    bf16   x_t tile
    h0_ref  : [tb, Hp]    f32    initial hidden state tile
    wxr_ref : [Dp, Hp]    bf16   Wr_x
    whr_ref : [Hp, Hp]    bf16   Wr_h
    wxuc_ref: [Dp, 2Hp]   bf16   [Wu_x | Wc_x]
    whu_ref : [Hp, Hp]    bf16   Wu_h
    whc_ref : [Hp, Hp]    bf16   Wc_h
    br_ref  : [1, Hp]     f32    br
    buc_ref : [1, 2Hp]    f32    [bu | bc]
    o_ref   : [tb, Hp]    out    h_t tile
    h_ref   : [tb, Hp]    f32    VMEM scratch carrying the recurrent state
    """
    @pl.when(pl.program_id(1) == 0)
    def _():
        h_ref[...] = h0_ref[...]

    Hp = h_ref.shape[-1]
    h = h_ref[...]                      # recurrent state stays f32
    h_bf = h.astype(jnp.bfloat16)
    x = x_ref[...]

    # Reset gate first: its sigmoid / r*h / bf16-cast tail (EUP + VPU) can
    # overlap the remaining MXU matmuls, and (r*h) @ Wc_h no longer has to wait
    # for wide fused matmuls to fully drain.
    r = jax.nn.sigmoid(
        jnp.dot(x, wxr_ref[...], preferred_element_type=jnp.float32)
        + jnp.dot(h_bf, whr_ref[...], preferred_element_type=jnp.float32)
        + br_ref[...])
    rh = (r * h).astype(jnp.bfloat16)

    # Fused update/candidate x-columns: one wide MXU matmul, bias added once.
    uc = jnp.dot(x, wxuc_ref[...], preferred_element_type=jnp.float32) + buc_ref[...]
    u = jax.nn.sigmoid(
        uc[:, :Hp] + jnp.dot(h_bf, whu_ref[...], preferred_element_type=jnp.float32))
    c = jnp.tanh(
        uc[:, Hp:] + jnp.dot(rh, whc_ref[...], preferred_element_type=jnp.float32))

    # h_new = u*h + (1-u)*c  ==  c + u*(h - c)   (one fewer VPU multiply)
    h_new = c + u * (h - c)
    h_ref[...] = h_new
    o_ref[...] = h_new.astype(o_ref.dtype)


# ---------------------------------------------------------------------------
# Parameter fusion / padding
# ---------------------------------------------------------------------------
def fuse_params(params, input_size, hidden_size, lane_multiple=None):
    """Fuse + pad per-gate weights into the kernel layout (bf16, MXU-aligned)."""
    if lane_multiple is None:
        lane_multiple = _lane_multiple()
    Dp = _round_up(input_size, lane_multiple)
    Hp = _round_up(hidden_size, lane_multiple)

    def padw(w, rows, cols):
        return jnp.pad(w, ((0, rows - w.shape[0]), (0, cols - w.shape[1])))

    return {
        "wxr": padw(params["wr_x"], Dp, Hp).astype(jnp.bfloat16),
        "whr": padw(params["wr_h"], Hp, Hp).astype(jnp.bfloat16),
        "wxuc": jnp.concatenate(
            [padw(params["wu_x"], Dp, Hp),
             padw(params["wc_x"], Dp, Hp)], axis=1).astype(jnp.bfloat16),
        "whu": padw(params["wu_h"], Hp, Hp).astype(jnp.bfloat16),
        "whc": padw(params["wc_h"], Hp, Hp).astype(jnp.bfloat16),
        "br": padw(params["br"], 1, Hp).astype(jnp.float32),
        "buc": jnp.concatenate(
            [padw(params["bu"], 1, Hp),
             padw(params["bc"], 1, Hp)], axis=1).astype(jnp.float32),
        "input_size": int(input_size),
        "hidden_size": int(hidden_size),
        "Dp": int(Dp),
        "Hp": int(Hp),
    }


# ---------------------------------------------------------------------------
# Wrappers
# ---------------------------------------------------------------------------
def gru_sequence(xs, h0, fused, *, block_b=128, interpret=False):
    """Run T GRU steps in one kernel.  xs: [T, B, D], h0: [B, H] -> hs: [T, B, H]."""
    T, B, D = xs.shape
    H = int(fused["hidden_size"])
    Dp = int(fused["Dp"])
    Hp = int(fused["Hp"])
    out_dtype = h0.dtype
    out_itemsize = jnp.dtype(out_dtype).itemsize

    # Even batch tiling (minimal padding), sublane aligned.
    nb = max(1, _cdiv(B, block_b))
    tb = _round_up(_cdiv(B, nb), 8)
    Bp = tb * nb

    # Pad/cast inputs; skip the extra HBM round-trip when already aligned.
    if B == Bp and D == Dp:
        xp = xs.astype(jnp.bfloat16)
    else:
        xp = jnp.zeros((T, Bp, Dp), jnp.bfloat16).at[:, :B, :D].set(
            xs.astype(jnp.bfloat16))
    if B == Bp and H == Hp:
        hp = h0.astype(jnp.float32)
    else:
        hp = jnp.zeros((Bp, Hp), jnp.float32).at[:B, :H].set(
            h0.astype(jnp.float32))

    w_args = (fused["wxr"], fused["whr"], fused["wxuc"], fused["whu"],
              fused["whc"], fused["br"], fused["buc"])
    w_bytes_1x = sum(int(a.nbytes) for a in w_args)

    # Only shard the batch axis across TensorCores when there are enough tiles
    # to amortize the duplicated per-core weight DMA (matters on megacore/v7x).
    batch_sem = "parallel" if nb > 2 else "arbitrary"

    def build_and_run(single_buffer_weights):
        def wspec(shape):
            idx = lambda b, t: (0, 0)
            if single_buffer_weights:
                return pl.BlockSpec(shape, idx,
                                    pipeline_mode=pl.Buffered(buffer_count=1))
            return pl.BlockSpec(shape, idx)

        in_specs = [
            pl.BlockSpec((None, tb, Dp), lambda b, t: (t, b, 0)),   # x_t tile
            pl.BlockSpec((tb, Hp), lambda b, t: (b, 0)),            # h0 tile
            wspec((Dp, Hp)),          # Wr_x        (VMEM-resident)
            wspec((Hp, Hp)),          # Wr_h
            wspec((Dp, 2 * Hp)),      # [Wu_x|Wc_x]
            wspec((Hp, Hp)),          # Wu_h
            wspec((Hp, Hp)),          # Wc_h
            wspec((1, Hp)),           # br
            wspec((1, 2 * Hp)),       # [bu|bc]
        ]
        out_specs = pl.BlockSpec((None, tb, Hp), lambda b, t: (t, b, 0))

        # VMEM budget: resident weights + double-buffered activation tiles
        # + f32 intermediates (r, rh, uc, u, c, h_new, carry, ...).
        w_bytes = w_bytes_1x * (1 if single_buffer_weights else 2)
        act_bytes = 2 * (tb * Dp * 2 + tb * Hp * 4 + tb * Hp * out_itemsize)
        inter_bytes = tb * Hp * 4 * 12
        need = int(1.25 * (w_bytes + act_bytes + inter_bytes))
        vmem_limit = min(_vmem_cap_bytes(), max(16 * 1024 * 1024, need))

        return pl.pallas_call(
            gru_seq_kernel,
            out_shape=jax.ShapeDtypeStruct((T, Bp, Hp), out_dtype),
            grid=(nb, T),
            in_specs=in_specs,
            out_specs=out_specs,
            scratch_shapes=[pltpu.VMEM((tb, Hp), jnp.float32)],
            compiler_params=pltpu.CompilerParams(
                dimension_semantics=(batch_sem, "arbitrary"),
                vmem_limit_bytes=int(vmem_limit)),
            interpret=interpret,
        )(xp, hp, *w_args)

    try:
        out = build_and_run(True)       # single-buffered resident weights
    except Exception:
        out = build_and_run(False)      # fallback: default pipelining

    return out[:, :B, :H]


def gru_cell(x, h, fused, *, block_b=128, interpret=False):
    """Single GRU-cell step.  x: [B, D], h: [B, H] -> h_new: [B, H]."""
    return gru_sequence(x[None], h, fused, block_b=block_b, interpret=interpret)[0]


# ---------------------------------------------------------------------------
# Parameters / references
# ---------------------------------------------------------------------------
def init_params(key, input_size, hidden_size, dtype=jnp.float32):
    """Deterministic init; weights in [in_features, out_features] layout."""
    ks = jax.random.split(key, 9)
    scale = 1.0 / jnp.sqrt(input_size + hidden_size)

    def w(k, shape):
        return (jax.random.uniform(k, shape, dtype) * 2.0 - 1.0) * scale

    return {
        "wr_x": w(ks[0], (input_size, hidden_size)),
        "wr_h": w(ks[1], (hidden_size, hidden_size)),
        "br":   w(ks[2], (1, hidden_size)),
        "wu_x": w(ks[3], (input_size, hidden_size)),
        "wu_h": w(ks[4], (hidden_size, hidden_size)),
        "bu":   w(ks[5], (1, hidden_size)),
        "wc_x": w(ks[6], (input_size, hidden_size)),
        "wc_h": w(ks[7], (hidden_size, hidden_size)),
        "bc":   w(ks[8], (1, hidden_size)),
    }


def gru_cell_ref_f32(x, h, p):
    """Pure-JAX f32 reference mirroring the PyTorch module forward exactly."""
    xg = jnp.concatenate([x, h], axis=-1)
    wr = jnp.concatenate([p["wr_x"], p["wr_h"]], axis=0)
    wu = jnp.concatenate([p["wu_x"], p["wu_h"]], axis=0)
    wc = jnp.concatenate([p["wc_x"], p["wc_h"]], axis=0)
    r = jax.nn.sigmoid(xg @ wr + p["br"])
    u = jax.nn.sigmoid(xg @ wu + p["bu"])
    xc = jnp.concatenate([x, r * h], axis=-1)
    c = jnp.tanh(xc @ wc + p["bc"])
    return u * h + (1.0 - u) * c


def gru_cell_ref_mixed(x, h, p):
    """Pure-JAX reference mirroring the kernel's bf16-matmul / f32-state math."""
    def mm(a, w):
        return jnp.dot(a.astype(jnp.bfloat16), w.astype(jnp.bfloat16),
                       preferred_element_type=jnp.float32)
    h32 = h.astype(jnp.float32)
    r = jax.nn.sigmoid(mm(x, p["wr_x"]) + mm(h32, p["wr_h"]) + p["br"])
    u = jax.nn.sigmoid(mm(x, p["wu_x"]) + mm(h32, p["wu_h"]) + p["bu"])
    c = jnp.tanh(mm(x, p["wc_x"]) + mm(r * h32, p["wc_h"]) + p["bc"])
    return c + u * (h32 - c)


# ---------------------------------------------------------------------------
if __name__ == "__main__":
    B, D, H, T = 2, 16, 32, 8

    key = jax.random.PRNGKey(0)
    k_x, k_h, k_p, k_xs = jax.random.split(key, 4)

    x = jax.random.normal(k_x, (B, D), jnp.float32)
    h = jax.random.normal(k_h, (B, H), jnp.float32)
    params = init_params(k_p, D, H)
    fused = fuse_params(params, D, H)

    # --- single step (module forward) ---
    h_new = gru_cell(x, h, fused)
    jax.block_until_ready(h_new)
    assert h_new.shape == (B, H)

    ref_mixed = gru_cell_ref_mixed(x, h, params)
    assert jnp.allclose(h_new, ref_mixed, atol=1e-2, rtol=1e-2), (
        float(jnp.max(jnp.abs(h_new - ref_mixed))))

    ref_f32 = gru_cell_ref_f32(x, h, params)
    assert jnp.allclose(h_new, ref_f32, atol=7e-2, rtol=7e-2), (
        float(jnp.max(jnp.abs(h_new - ref_f32))))

    # --- fused time loop (weights stream from HBM once for all T steps) ---
    xs = jax.random.normal(k_xs, (T, B, D), jnp.float32)
    hs = gru_sequence(xs, h, fused)
    jax.block_until_ready(hs)
    assert hs.shape == (T, B, H)

    h_ref = h
    ref_steps = []
    for t in range(T):
        h_ref = gru_cell_ref_mixed(xs[t], h_ref, params)
        ref_steps.append(h_ref)
    ref_seq = jnp.stack(ref_steps)
    assert jnp.allclose(hs, ref_seq, atol=3e-2, rtol=3e-2), (
        float(jnp.max(jnp.abs(hs - ref_seq))))

    print("KERNEL_OK")
</pallas_src>

<mosaic_0001>
module attributes {stable_mosaic.version = 11 : i64} {
  func.func @gru_seq_kernel(%arg0: i32, %arg1: i32, %arg2: memref<1x8x128xbf16, #tpu.memory_space<vmem>>, %arg3: memref<8x128xf32, #tpu.memory_space<vmem>>, %arg4: memref<128x128xbf16, #tpu.memory_space<vmem>>, %arg5: memref<128x128xbf16, #tpu.memory_space<vmem>>, %arg6: memref<128x256xbf16, #tpu.memory_space<vmem>>, %arg7: memref<128x128xbf16, #tpu.memory_space<vmem>>, %arg8: memref<128x128xbf16, #tpu.memory_space<vmem>>, %arg9: memref<1x128xf32, #tpu.memory_space<vmem>>, %arg10: memref<1x256xf32, #tpu.memory_space<vmem>>, %arg11: memref<1x8x128xf32, #tpu.memory_space<vmem>>, %arg12: memref<8x128xf32, #tpu.memory_space<vmem>>) attributes {dimension_semantics = [#tpu.dimension_semantics<arbitrary>, #tpu.dimension_semantics<arbitrary>], iteration_bounds = array<i64: 1, 1>, scalar_prefetch = 0 : i64, scratch_operands = 1 : i64, tpu.core_type = #tpu.core_type<tc>, window_params = [{transform_indices = @transform_0, window_bounds = array<i64: 1, 8, 128>}, {transform_indices = @transform_1, window_bounds = array<i64: 8, 128>}, {pipeline_mode = #tpu.pipeline_mode<synchronous>, transform_indices = @transform_2, window_bounds = array<i64: 128, 128>}, {pipeline_mode = #tpu.pipeline_mode<synchronous>, transform_indices = @transform_3, window_bounds = array<i64: 128, 128>}, {pipeline_mode = #tpu.pipeline_mode<synchronous>, transform_indices = @transform_4, window_bounds = array<i64: 128, 256>}, {pipeline_mode = #tpu.pipeline_mode<synchronous>, transform_indices = @transform_5, window_bounds = array<i64: 128, 128>}, {pipeline_mode = #tpu.pipeline_mode<synchronous>, transform_indices = @transform_6, window_bounds = array<i64: 128, 128>}, {pipeline_mode = #tpu.pipeline_mode<synchronous>, transform_indices = @transform_7, window_bounds = array<i64: 1, 128>}, {pipeline_mode = #tpu.pipeline_mode<synchronous>, transform_indices = @transform_8, window_bounds = array<i64: 1, 256>}, {transform_indices = @transform_9, window_bounds = array<i64: 1, 8, 128>}]} {
    %c0_i32 = arith.constant 0 : i32
    %0 = arith.cmpi eq, %arg1, %c0_i32 : i32
    %1 = arith.extui %0 : i1 to i32
    %c0_i32_0 = arith.constant 0 : i32
    %2 = arith.cmpi ne, %1, %c0_i32_0 : i32
    scf.if %2 {
      %c0_30 = arith.constant 0 : index
      %c0_31 = arith.constant 0 : index
      %48 = vector.load %arg3[%c0_30, %c0_31] : memref<8x128xf32, #tpu.memory_space<vmem>>, vector<8x128xf32>
      %c0_32 = arith.constant 0 : index
      %c0_33 = arith.constant 0 : index
      %49 = vector.load %arg12[%c0_32, %c0_33] : memref<8x128xf32, #tpu.memory_space<vmem>>, vector<8x128xf32>
      tpu.vector_store %arg12[%c0_32, %c0_33], %48 {strides = array<i32>} : memref<8x128xf32, #tpu.memory_space<vmem>>, vector<8x128xf32>,
    } else {
    }
    %c0 = arith.constant 0 : index
    %c0_1 = arith.constant 0 : index
    %3 = vector.load %arg12[%c0, %c0_1] : memref<8x128xf32, #tpu.memory_space<vmem>>, vector<8x128xf32>
    %4 = arith.truncf %3 : vector<8x128xf32> to vector<8x128xbf16>
    %c0_2 = arith.constant 0 : index
    %c0_3 = arith.constant 0 : index
    %c0_4 = arith.constant 0 : index
    %5 = vector.load %arg2[%c0_2, %c0_3, %c0_4] : memref<1x8x128xbf16, #tpu.memory_space<vmem>>, vector<1x8x128xbf16>
    %6 = vector.shape_cast %5 : vector<1x8x128xbf16> to vector<8x128xbf16>
    %c0_5 = arith.constant 0 : index
    %c0_6 = arith.constant 0 : index
    %7 = vector.load %arg4[%c0_5, %c0_6] : memref<128x128xbf16, #tpu.memory_space<vmem>>, vector<128x128xbf16>
    %cst = arith.constant dense<0.000000e+00> : vector<8x128xf32>
    %8 = tpu.matmul %6, %7, %cst {dimension_numbers = #tpu.dot_dimension_numbers<[1], [0], [0], [1], [0, 0, 1, 1], [], []>} : vector<8x128xbf16>, vector<128x128xbf16>, vector<8x128xf32> -> vector<8x128xf32>
    %c0_7 = arith.constant 0 : index
    %c0_8 = arith.constant 0 : index
    %9 = vector.load %arg5[%c0_7, %c0_8] : memref<128x128xbf16, #tpu.memory_space<vmem>>, vector<128x128xbf16>
    %cst_9 = arith.constant dense<0.000000e+00> : vector<8x128xf32>
    %10 = tpu.matmul %4, %9, %cst_9 {dimension_numbers = #tpu.dot_dimension_numbers<[1], [0], [0], [1], [0, 0, 1, 1], [], []>} : vector<8x128xbf16>, vector<128x128xbf16>, vector<8x128xf32> -> vector<8x128xf32>
    %11 = arith.addf %8, %10 : vector<8x128xf32>
    %c0_10 = arith.constant 0 : index
    %c0_11 = arith.constant 0 : index
    %12 = vector.load %arg9[%c0_10, %c0_11] : memref<1x128xf32, #tpu.memory_space<vmem>>, vector<1x128xf32>
    %13 = vector.broadcast %12 : vector<1x128xf32> to vector<8x128xf32>
    %14 = arith.addf %11, %13 : vector<8x128xf32>
    %15 = arith.negf %14 : vector<8x128xf32>
    %16 = math.exp %15 : vector<8x128xf32>
    %cst_12 = arith.constant 1.000000e+00 : f32
    %17 = vector.broadcast %cst_12 : f32 to vector<8x128xf32>
    %18 = arith.addf %17, %16 : vector<8x128xf32>
    %19 = arith.divf %17, %18 : vector<8x128xf32>
    %20 = arith.mulf %19, %3 : vector<8x128xf32>
    %21 = arith.truncf %20 : vector<8x128xf32> to vector<8x128xbf16>
    %c0_13 = arith.constant 0 : index
    %c0_14 = arith.constant 0 : index
    %22 = vector.load %arg6[%c0_13, %c0_14] : memref<128x256xbf16, #tpu.memory_space<vmem>>, vector<128x256xbf16>
    %cst_15 = arith.constant dense<0.000000e+00> : vector<8x256xf32>
    %23 = tpu.matmul %6, %22, %cst_15 {dimension_numbers = #tpu.dot_dimension_numbers<[1], [0], [0], [1], [0, 0, 1, 1], [], []>} : vector<8x128xbf16>, vector<128x256xbf16>, vector<8x256xf32> -> vector<8x256xf32>
    %c0_16 = arith.constant 0 : index
    %c0_17 = arith.constant 0 : index
    %24 = vector.load %arg10[%c0_16, %c0_17] : memref<1x256xf32, #tpu.memory_space<vmem>>, vector<1x256xf32>
    %25 = vector.broadcast %24 : vector<1x256xf32> to vector<8x256xf32>
    %26 = arith.addf %23, %25 : vector<8x256xf32>
    %27 = vector.extract_strided_slice %26 {offsets = [0, 0], sizes = [8, 128], strides = [1, 1]} : vector<8x256xf32> to vector<8x128xf32>
    %c0_18 = arith.constant 0 : index
    %c0_19 = arith.constant 0 : index
    %28 = vector.load %arg7[%c0_18, %c0_19] : memref<128x128xbf16, #tpu.memory_space<vmem>>, vector<128x128xbf16>
    %cst_20 = arith.constant dense<0.000000e+00> : vector<8x128xf32>
    %29 = tpu.matmul %4, %28, %cst_20 {dimension_numbers = #tpu.dot_dimension_numbers<[1], [0], [0], [1], [0, 0, 1, 1], [], []>} : vector<8x128xbf16>, vector<128x128xbf16>, vector<8x128xf32> -> vector<8x128xf32>
    %30 = arith.addf %27, %29 : vector<8x128xf32>
    %31 = arith.negf %30 : vector<8x128xf32>
    %32 = math.exp %31 : vector<8x128xf32>
    %cst_21 = arith.constant 1.000000e+00 : f32
    %33 = vector.broadcast %cst_21 : f32 to vector<8x128xf32>
    %34 = arith.addf %33, %32 : vector<8x128xf32>
    %35 = arith.divf %33, %34 : vector<8x128xf32>
    %36 = vector.extract_strided_slice %26 {offsets = [0, 128], sizes = [8, 128], strides = [1, 1]} : vector<8x256xf32> to vector<8x128xf32>
    %c0_22 = arith.constant 0 : index
    %c0_23 = arith.constant 0 : index
    %37 = vector.load %arg8[%c0_22, %c0_23] : memref<128x128xbf16, #tpu.memory_space<vmem>>, vector<128x128xbf16>
    %cst_24 = arith.constant dense<0.000000e+00> : vector<8x128xf32>
    %38 = tpu.matmul %21, %37, %cst_24 {dimension_numbers = #tpu.dot_dimension_numbers<[1], [0], [0], [1], [0, 0, 1, 1], [], []>} : vector<8x128xbf16>, vector<128x128xbf16>, vector<8x128xf32> -> vector<8x128xf32>
    %39 = arith.addf %36, %38 : vector<8x128xf32>
    %40 = math.tanh %39 : vector<8x128xf32>
    %41 = arith.subf %3, %40 : vector<8x128xf32>
    %42 = arith.mulf %35, %41 : vector<8x128xf32>
    %43 = arith.addf %40, %42 : vector<8x128xf32>
    %c0_25 = arith.constant 0 : index
    %c0_26 = arith.constant 0 : index
    %44 = vector.load %arg12[%c0_25, %c0_26] : memref<8x128xf32, #tpu.memory_space<vmem>>, vector<8x128xf32>
    tpu.vector_store %arg12[%c0_25, %c0_26], %43 {strides = array<i32>} : memref<8x128xf32, #tpu.memory_space<vmem>>, vector<8x128xf32>,
    %c0_27 = arith.constant 0 : index
    %c0_28 = arith.constant 0 : index
    %c0_29 = arith.constant 0 : index
    %45 = vector.load %arg11[%c0_27, %c0_28, %c0_29] : memref<1x8x128xf32, #tpu.memory_space<vmem>>, vector<1x8x128xf32>
    %46 = vector.shape_cast %45 : vector<1x8x128xf32> to vector<8x128xf32>
    %47 = vector.shape_cast %43 : vector<8x128xf32> to vector<1x8x128xf32>
    tpu.vector_store %arg11[%c0_27, %c0_28, %c0_29], %47 {strides = array<i32>} : memref<1x8x128xf32, #tpu.memory_space<vmem>>, vector<1x8x128xf32>,
    return
  }
  func.func @transform_0(%arg0: i32, %arg1: i32) -> (i32, i32, i32) {
    %c0_i32 = arith.constant 0 : i32
    %c0_i32_0 = arith.constant 0 : i32
    return %arg1, %arg0, %c0_i32 : i32, i32, i32
  }
  func.func @transform_1(%arg0: i32, %arg1: i32) -> (i32, i32) {
    %c0_i32 = arith.constant 0 : i32
    %c0_i32_0 = arith.constant 0 : i32
    return %arg0, %c0_i32 : i32, i32
  }
  func.func @transform_2(%arg0: i32, %arg1: i32) -> (i32, i32) {
    %c0_i32 = arith.constant 0 : i32
    %c0_i32_0 = arith.constant 0 : i32
    %c0_i32_1 = arith.constant 0 : i32
    return %c0_i32, %c0_i32_0 : i32, i32
  }
  func.func @transform_3(%arg0: i32, %arg1: i32) -> (i32, i32) {
    %c0_i32 = arith.constant 0 : i32
    %c0_i32_0 = arith.constant 0 : i32
    %c0_i32_1 = arith.constant 0 : i32
    return %c0_i32, %c0_i32_0 : i32, i32
  }
  func.func @transform_4(%arg0: i32, %arg1: i32) -> (i32, i32) {
    %c0_i32 = arith.constant 0 : i32
    %c0_i32_0 = arith.constant 0 : i32
    %c0_i32_1 = arith.constant 0 : i32
    return %c0_i32, %c0_i32_0 : i32, i32
  }
  func.func @transform_5(%arg0: i32, %arg1: i32) -> (i32, i32) {
    %c0_i32 = arith.constant 0 : i32
    %c0_i32_0 = arith.constant 0 : i32
    %c0_i32_1 = arith.constant 0 : i32
    return %c0_i32, %c0_i32_0 : i32, i32
  }
  func.func @transform_6(%arg0: i32, %arg1: i32) -> (i32, i32) {
    %c0_i32 = arith.constant 0 : i32
    %c0_i32_0 = arith.constant 0 : i32
    %c0_i32_1 = arith.constant 0 : i32
    return %c0_i32, %c0_i32_0 : i32, i32
  }
  func.func @transform_7(%arg0: i32, %arg1: i32) -> (i32, i32) {
    %c0_i32 = arith.constant 0 : i32
    %c0_i32_0 = arith.constant 0 : i32
    %c0_i32_1 = arith.constant 0 : i32
    return %c0_i32, %c0_i32_0 : i32, i32
  }
  func.func @transform_8(%arg0: i32, %arg1: i32) -> (i32, i32) {
    %c0_i32 = arith.constant 0 : i32
    %c0_i32_0 = arith.constant 0 : i32
    %c0_i32_1 = arith.constant 0 : i32
    return %c0_i32, %c0_i32_0 : i32, i32
  }
  func.func @transform_9(%arg0: i32, %arg1: i32) -> (i32, i32, i32) {
    %c0_i32 = arith.constant 0 : i32
    %c0_i32_0 = arith.constant 0 : i32
    return %arg1, %arg0, %c0_i32 : i32, i32, i32
  }
}

module attributes {stable_mosaic.version = 11 : i64} {
  func.func @gru_seq_kernel(%arg0: i32, %arg1: i32, %arg2: memref<1x8x128xbf16, #tpu.memory_space<vmem>>, %arg3: memref<8x128xf32, #tpu.memory_space<vmem>>, %arg4: memref<128x128xbf16, #tpu.memory_space<vmem>>, %arg5: memref<128x128xbf16, #tpu.memory_space<vmem>>, %arg6: memref<128x256xbf16, #tpu.memory_space<vmem>>, %arg7: memref<128x128xbf16, #tpu.memory_space<vmem>>, %arg8: memref<128x128xbf16, #tpu.memory_space<vmem>>, %arg9: memref<1x128xf32, #tpu.memory_space<vmem>>, %arg10: memref<1x256xf32, #tpu.memory_space<vmem>>, %arg11: memref<1x8x128xf32, #tpu.memory_space<vmem>>, %arg12: memref<8x128xf32, #tpu.memory_space<vmem>>) attributes {dimension_semantics = [#tpu.dimension_semantics<arbitrary>, #tpu.dimension_semantics<arbitrary>], iteration_bounds = array<i64: 1, 1>, scalar_prefetch = 0 : i64, scratch_operands = 1 : i64, tpu.core_type = #tpu.core_type<tc>, window_params = [{transform_indices = @transform_0, window_bounds = array<i64: 1, 8, 128>}, {transform_indices = @transform_1, window_bounds = array<i64: 8, 128>}, {pipeline_mode = #tpu.pipeline_mode<synchronous>, transform_indices = @transform_2, window_bounds = array<i64: 128, 128>}, {pipeline_mode = #tpu.pipeline_mode<synchronous>, transform_indices = @transform_3, window_bounds = array<i64: 128, 128>}, {pipeline_mode = #tpu.pipeline_mode<synchronous>, transform_indices = @transform_4, window_bounds = array<i64: 128, 256>}, {pipeline_mode = #tpu.pipeline_mode<synchronous>, transform_indices = @transform_5, window_bounds = array<i64: 128, 128>}, {pipeline_mode = #tpu.pipeline_mode<synchronous>, transform_indices = @transform_6, window_bounds = array<i64: 128, 128>}, {pipeline_mode = #tpu.pipeline_mode<synchronous>, transform_indices = @transform_7, window_bounds = array<i64: 1, 128>}, {pipeline_mode = #tpu.pipeline_mode<synchronous>, transform_indices = @transform_8, window_bounds = array<i64: 1, 256>}, {transform_indices = @transform_9, window_bounds = array<i64: 1, 8, 128>}]} {
    %c0_i32 = arith.constant 0 : i32
    %0 = arith.cmpi eq, %arg1, %c0_i32 : i32
    %1 = arith.extui %0 : i1 to i32
    %c0_i32_0 = arith.constant 0 : i32
    %2 = arith.cmpi ne, %1, %c0_i32_0 : i32
    scf.if %2 {
      %c0_30 = arith.constant 0 : index
      %c0_31 = arith.constant 0 : index
      %48 = vector.load %arg3[%c0_30, %c0_31] : memref<8x128xf32, #tpu.memory_space<vmem>>, vector<8x128xf32>
      %c0_32 = arith.constant 0 : index
      %c0_33 = arith.constant 0 : index
      %49 = vector.load %arg12[%c0_32, %c0_33] : memref<8x128xf32, #tpu.memory_space<vmem>>, vector<8x128xf32>
      tpu.vector_store %arg12[%c0_32, %c0_33], %48 {strides = array<i32>} : memref<8x128xf32, #tpu.memory_space<vmem>>, vector<8x128xf32>,
    } else {
    }
    %c0 = arith.constant 0 : index
    %c0_1 = arith.constant 0 : index
    %3 = vector.load %arg12[%c0, %c0_1] : memref<8x128xf32, #tpu.memory_space<vmem>>, vector<8x128xf32>
    %4 = arith.truncf %3 : vector<8x128xf32> to vector<8x128xbf16>
    %c0_2 = arith.constant 0 : index
    %c0_3 = arith.constant 0 : index
    %c0_4 = arith.constant 0 : index
    %5 = vector.load %arg2[%c0_2, %c0_3, %c0_4] : memref<1x8x128xbf16, #tpu.memory_space<vmem>>, vector<1x8x128xbf16>
    %6 = vector.shape_cast %5 : vector<1x8x128xbf16> to vector<8x128xbf16>
    %c0_5 = arith.constant 0 : index
    %c0_6 = arith.constant 0 : index
    %7 = vector.load %arg4[%c0_5, %c0_6] : memref<128x128xbf16, #tpu.memory_space<vmem>>, vector<128x128xbf16>
    %cst = arith.constant dense<0.000000e+00> : vector<8x128xf32>
    %8 = tpu.matmul %6, %7, %cst {dimension_numbers = #tpu.dot_dimension_numbers<[1], [0], [0], [1], [0, 0, 1, 1], [], []>} : vector<8x128xbf16>, vector<128x128xbf16>, vector<8x128xf32> -> vector<8x128xf32>
    %c0_7 = arith.constant 0 : index
    %c0_8 = arith.constant 0 : index
    %9 = vector.load %arg5[%c0_7, %c0_8] : memref<128x128xbf16, #tpu.memory_space<vmem>>, vector<128x128xbf16>
    %cst_9 = arith.constant dense<0.000000e+00> : vector<8x128xf32>
    %10 = tpu.matmul %4, %9, %cst_9 {dimension_numbers = #tpu.dot_dimension_numbers<[1], [0], [0], [1], [0, 0, 1, 1], [], []>} : vector<8x128xbf16>, vector<128x128xbf16>, vector<8x128xf32> -> vector<8x128xf32>
    %11 = arith.addf %8, %10 : vector<8x128xf32>
    %c0_10 = arith.constant 0 : index
    %c0_11 = arith.constant 0 : index
    %12 = vector.load %arg9[%c0_10, %c0_11] : memref<1x128xf32, #tpu.memory_space<vmem>>, vector<1x128xf32>
    %13 = vector.broadcast %12 : vector<1x128xf32> to vector<8x128xf32>
    %14 = arith.addf %11, %13 : vector<8x128xf32>
    %15 = arith.negf %14 : vector<8x128xf32>
    %16 = math.exp %15 : vector<8x128xf32>
    %cst_12 = arith.constant 1.000000e+00 : f32
    %17 = vector.broadcast %cst_12 : f32 to vector<8x128xf32>
    %18 = arith.addf %17, %16 : vector<8x128xf32>
    %19 = arith.divf %17, %18 : vector<8x128xf32>
    %20 = arith.mulf %19, %3 : vector<8x128xf32>
    %21 = arith.truncf %20 : vector<8x128xf32> to vector<8x128xbf16>
    %c0_13 = arith.constant 0 : index
    %c0_14 = arith.constant 0 : index
    %22 = vector.load %arg6[%c0_13, %c0_14] : memref<128x256xbf16, #tpu.memory_space<vmem>>, vector<128x256xbf16>
    %cst_15 = arith.constant dense<0.000000e+00> : vector<8x256xf32>
    %23 = tpu.matmul %6, %22, %cst_15 {dimension_numbers = #tpu.dot_dimension_numbers<[1], [0], [0], [1], [0, 0, 1, 1], [], []>} : vector<8x128xbf16>, vector<128x256xbf16>, vector<8x256xf32> -> vector<8x256xf32>
    %c0_16 = arith.constant 0 : index
    %c0_17 = arith.constant 0 : index
    %24 = vector.load %arg10[%c0_16, %c0_17] : memref<1x256xf32, #tpu.memory_space<vmem>>, vector<1x256xf32>
    %25 = vector.broadcast %24 : vector<1x256xf32> to vector<8x256xf32>
    %26 = arith.addf %23, %25 : vector<8x256xf32>
    %27 = vector.extract_strided_slice %26 {offsets = [0, 0], sizes = [8, 128], strides = [1, 1]} : vector<8x256xf32> to vector<8x128xf32>
    %c0_18 = arith.constant 0 : index
    %c0_19 = arith.constant 0 : index
    %28 = vector.load %arg7[%c0_18, %c0_19] : memref<128x128xbf16, #tpu.memory_space<vmem>>, vector<128x128xbf16>
    %cst_20 = arith.constant dense<0.000000e+00> : vector<8x128xf32>
    %29 = tpu.matmul %4, %28, %cst_20 {dimension_numbers = #tpu.dot_dimension_numbers<[1], [0], [0], [1], [0, 0, 1, 1], [], []>} : vector<8x128xbf16>, vector<128x128xbf16>, vector<8x128xf32> -> vector<8x128xf32>
    %30 = arith.addf %27, %29 : vector<8x128xf32>
    %31 = arith.negf %30 : vector<8x128xf32>
    %32 = math.exp %31 : vector<8x128xf32>
    %cst_21 = arith.constant 1.000000e+00 : f32
    %33 = vector.broadcast %cst_21 : f32 to vector<8x128xf32>
    %34 = arith.addf %33, %32 : vector<8x128xf32>
    %35 = arith.divf %33, %34 : vector<8x128xf32>
    %36 = vector.extract_strided_slice %26 {offsets = [0, 128], sizes = [8, 128], strides = [1, 1]} : vector<8x256xf32> to vector<8x128xf32>
    %c0_22 = arith.constant 0 : index
    %c0_23 = arith.constant 0 : index
    %37 = vector.load %arg8[%c0_22, %c0_23] : memref<128x128xbf16, #tpu.memory_space<vmem>>, vector<128x128xbf16>
    %cst_24 = arith.constant dense<0.000000e+00> : vector<8x128xf32>
    %38 = tpu.matmul %21, %37, %cst_24 {dimension_numbers = #tpu.dot_dimension_numbers<[1], [0], [0], [1], [0, 0, 1, 1], [], []>} : vector<8x128xbf16>, vector<128x128xbf16>, vector<8x128xf32> -> vector<8x128xf32>
    %39 = arith.addf %36, %38 : vector<8x128xf32>
    %40 = math.tanh %39 : vector<8x128xf32>
    %41 = arith.subf %3, %40 : vector<8x128xf32>
    %42 = arith.mulf %35, %41 : vector<8x128xf32>
    %43 = arith.addf %40, %42 : vector<8x128xf32>
    %c0_25 = arith.constant 0 : index
    %c0_26 = arith.constant 0 : index
    %44 = vector.load %arg12[%c0_25, %c0_26] : memref<8x128xf32, #tpu.memory_space<vmem>>, vector<8x128xf32>
    tpu.vector_store %arg12[%c0_25, %c0_26], %43 {strides = array<i32>} : memref<8x128xf32, #tpu.memory_space<vmem>>, vector<8x128xf32>,
    %c0_27 = arith.constant 0 : index
    %c0_28 = arith.constant 0 : index
    %c0_29 = arith.constant 0 : index
    %45 = vector.load %arg11[%c0_27, %c0_28, %c0_29] : memref<1x8x128xf32, #tpu.memory_space<vmem>>, vector<1x8x128xf32>
    %46 = vector.shape_cast %45 : vector<1x8x128xf32> to vector<8x128xf32>
    %47 = vector.shape_cast %43 : vector<8x128xf32> to vector<1x8x128xf32>
    tpu.vector_store %arg11[%c0_27, %c0_28, %c0_29], %47 {strides = array<i32>} : memref<1x8x128xf32, #tpu.memory_space<vmem>>, vector<1x8x128xf32>,
    return
  }
  func.func @transform_0(%arg0: i32, %arg1: i32) -> (i32, i32, i32) {
    %c0_i32 = arith.constant 0 : i32
    %c0_i32_0 = arith.constant 0 : i32
    return %arg1, %arg0, %c0_i32 : i32, i32, i32
  }
  func.func @transform_1(%arg0: i32, %arg1: i32) -> (i32, i32) {
    %c0_i32 = arith.constant 0 : i32
    %c0_i32_0 = arith.constant 0 : i32
    return %arg0, %c0_i32 : i32, i32
  }
  func.func @transform_2(%arg0: i32, %arg1: i32) -> (i32, i32) {
    %c0_i32 = arith.constant 0 : i32
    %c0_i32_0 = arith.constant 0 : i32
    %c0_i32_1 = arith.constant 0 : i32
    return %c0_i32, %c0_i32_0 : i32, i32
  }
  func.func @transform_3(%arg0: i32, %arg1: i32) -> (i32, i32) {
    %c0_i32 = arith.constant 0 : i32
    %c0_i32_0 = arith.constant 0 : i32
    %c0_i32_1 = arith.constant 0 : i32
    return %c0_i32, %c0_i32_0 : i32, i32
  }
  func.func @transform_4(%arg0: i32, %arg1: i32) -> (i32, i32) {
    %c0_i32 = arith.constant 0 : i32
    %c0_i32_0 = arith.constant 0 : i32
    %c0_i32_1 = arith.constant 0 : i32
    return %c0_i32, %c0_i32_0 : i32, i32
  }
  func.func @transform_5(%arg0: i32, %arg1: i32) -> (i32, i32) {
    %c0_i32 = arith.constant 0 : i32
    %c0_i32_0 = arith.constant 0 : i32
    %c0_i32_1 = arith.constant 0 : i32
    return %c0_i32, %c0_i32_0 : i32, i32
  }
  func.func @transform_6(%arg0: i32, %arg1: i32) -> (i32, i32) {
    %c0_i32 = arith.constant 0 : i32
    %c0_i32_0 = arith.constant 0 : i32
    %c0_i32_1 = arith.constant 0 : i32
    return %c0_i32, %c0_i32_0 : i32, i32
  }
  func.func @transform_7(%arg0: i32, %arg1: i32) -> (i32, i32) {
    %c0_i32 = arith.constant 0 : i32
    %c0_i32_0 = arith.constant 0 : i32
    %c0_i32_1 = arith.constant 0 : i32
    return %c0_i32, %c0_i32_0 : i32, i32
  }
  func.func @transform_8(%arg0: i32, %arg1: i32) -> (i32, i32) {
    %c0_i32 = arith.constant 0 : i32
    %c0_i32_0 = arith.constant 0 : i32
    %c0_i32_1 = arith.constant 0 : i32
    return %c0_i32, %c0_i32_0 : i32, i32
  }
  func.func @transform_9(%arg0: i32, %arg1: i32) -> (i32, i32, i32) {
    %c0_i32 = arith.constant 0 : i32
    %c0_i32_0 = arith.constant 0 : i32
    return %arg1, %arg0, %c0_i32 : i32, i32, i32
  }
}

</mosaic_0001>

<llo_original>
// kernel: tpu_custom_call.1
$region0: #{tpu_custom_call.1}
  #allocation0 [shape = 'u32[]', space=smem, size = 0x4, offset = 0x4, fixed_abs, tag = 'smem constant byte address 0x4 - core index']
  #allocation1 [shape = 'u32[144,128]{1,0:T(1,128)}', space=vmem, size = 0x12000, scoped, tag = 'internal scratch']
  #allocation2 [shape = 'f32[8,128]{1,0:T(8,128)}', space=vmem, size = 0x1000, scoped, tag = 'scratch operand']
  %s0 = inlined_call_operand.hbm [shape: bf16[1,8,128], index: 0, kind: input, shape index: {}]
  %s1 = inlined_call_operand.hbm [shape: f32[8,128], index: 1, kind: input, shape index: {}]
  %s2 = inlined_call_operand.hbm [shape: bf16[128,128], index: 2, kind: input, shape index: {}]
  %s3 = inlined_call_operand.hbm [shape: bf16[128,128], index: 3, kind: input, shape index: {}]
  %s4 = inlined_call_operand.hbm [shape: bf16[128,256], index: 4, kind: input, shape index: {}]
  %s5 = inlined_call_operand.hbm [shape: bf16[128,128], index: 5, kind: input, shape index: {}]
  %s6 = inlined_call_operand.hbm [shape: bf16[128,128], index: 6, kind: input, shape index: {}]
  %s7 = inlined_call_operand.vmem [shape: f32[1,128], index: 7, kind: input, shape index: {}]
  %s8 = inlined_call_operand.vmem [shape: f32[1,256], index: 8, kind: input, shape index: {}]
  %s9 = inlined_call_operand.hbm [shape: f32[1,8,128], index: 9, kind: output, shape index: {}]
  %s10 = sld [smem:[#allocation0]]
  $region78: #{tpu_custom_call.1} parent=0
    _
  %s12 = ssub.s32 1, %s10
  %s13 = scalar_select 0, %s12, %s10
  $region1: #{tpu_custom_call.1} parent=0
    #allocation3 [shape = 'u8[2048]{0}', space=vmem, size = 0x800, scoped, tag = 'input window, operand 0, single buffered']
    #allocation4 [shape = 's32[1]{0}', space=sflag, size = 0x4, scoped, tag = 'scoped memory for tpu_custom_call.1']
    #allocation5 [shape = 's32[1]{0}', space=sflag, size = 0x4, scoped, tag = 'scoped memory for tpu_custom_call.1']
    #allocation6 [shape = 'u8[4096]{0}', space=vmem, size = 0x1000, scoped, tag = 'input window, operand 1, single buffered']
    #allocation7 [shape = 's32[1]{0}', space=sflag, size = 0x4, scoped, tag = 'scoped memory for tpu_custom_call.1']
    #allocation8 [shape = 'u8[32768]{0}', space=vmem, size = 0x8000, scoped, tag = 'input window, operand 2, single buffered']
    #allocation9 [shape = 'u8[32768]{0}', space=vmem, size = 0x8000, scoped, tag = 'input window, operand 3, single buffered']
    #allocation10 [shape = 's32[1]{0}', space=sflag, size = 0x4, scoped, tag = 'scoped memory for tpu_custom_call.1']
    #allocation11 [shape = 'u8[65536]{0}', space=vmem, size = 0x10000, scoped, tag = 'input window, operand 4, single buffered']
    #allocation12 [shape = 'u8[32768]{0}', space=vmem, size = 0x8000, scoped, tag = 'input window, operand 5, single buffered']
    #allocation13 [shape = 's32[1]{0}', space=sflag, size = 0x4, scoped, tag = 'scoped memory for tpu_custom_call.1']
    #allocation14 [shape = 'u8[32768]{0}', space=vmem, size = 0x8000, scoped, tag = 'input window, operand 6, single buffered']
    #allocation15 [shape = 'u8[4096]{0}', space=vmem, size = 0x1000, scoped, tag = 'output window, operand 0, single buffered']
    %14 = vsyncpa [#allocation4], 0
    %15 = vsyncpa [#allocation7], 0
    %16 = vsyncpa [#allocation10], 0
    %17 = vsyncpa [#allocation13], 0
    %18 = vsyncpa [#allocation5], 0
    // Predicated region
    $region2: #{tpu_custom_call.1} parent=1 // pred_check
      _
    $region3: #{tpu_custom_call.1} parent=1 // pred_check_branch
      %20 = sbr.rel (0) target = $region5
    $region4: #{tpu_custom_call.1} parent=1 // pred_region
      %s22 = ssub.s32 64, 64
      %23 = vsyncadd [#allocation4], %s22
      %s25 = sshll.u32 [#allocation3], 4
      %s26 = int_to_ptr.vmem [resolvable:$true] %s25
      %28 = dma.hbm_to_vmem [thread:$0]  %s0, 64, %s26, [#allocation4]
    $region5: #{tpu_custom_call.1} parent=1 // pred_fallthru
      _
    // Predicated region
    $region6: #{tpu_custom_call.1} parent=1 // pred_check
      _
    $region7: #{tpu_custom_call.1} parent=1 // pred_check_branch
      %30 = sbr.rel (0) target = $region9
    $region8: #{tpu_custom_call.1} parent=1 // pred_region
      %s32 = ssub.s32 128, 128
      %33 = vsyncadd [#allocation7], %s32
      %s35 = sshll.u32 [#allocation6], 4
      %s36 = int_to_ptr.vmem [resolvable:$true] %s35
      %38 = dma.hbm_to_vmem [thread:$0]  %s1, 128, %s36, [#allocation7]
    $region9: #{tpu_custom_call.1} parent=1 // pred_fallthru
      _
    // Predicated region
    $region10: #{tpu_custom_call.1} parent=1 // pred_check
      _
    $region11: #{tpu_custom_call.1} parent=1 // pred_check_branch
      %40 = sbr.rel (0) target = $region13
    $region12: #{tpu_custom_call.1} parent=1 // pred_region
      %s42 = ssub.s32 1024, 1024
      %43 = vsyncadd [#allocation7], %s42
      %s44 = sshll.u32 [#allocation8], 4
      %s45 = int_to_ptr.vmem [resolvable:$true] %s44
      %50 = dma.hbm_to_vmem [thread:$0]  %s2, 1024, %s45, [#allocation7], 64, 64, 4
    $region13: #{tpu_custom_call.1} parent=1 // pred_fallthru
      _
    // Predicated region
    $region14: #{tpu_custom_call.1} parent=1 // pred_check
      _
    $region15: #{tpu_custom_call.1} parent=1 // pred_check_branch
      %52 = sbr.rel (0) target = $region17
    $region16: #{tpu_custom_call.1} parent=1 // pred_region
      %s54 = ssub.s32 1024, 1024
      %55 = vsyncadd [#allocation10], %s54
      %s56 = sshll.u32 [#allocation9], 4
      %s57 = int_to_ptr.vmem [resolvable:$true] %s56
      %62 = dma.hbm_to_vmem [thread:$0]  %s3, 1024, %s57, [#allocation10], 64, 64, 4
    $region17: #{tpu_custom_call.1} parent=1 // pred_fallthru
      _
    // Predicated region
    $region18: #{tpu_custom_call.1} parent=1 // pred_check
      _
    $region19: #{tpu_custom_call.1} parent=1 // pred_check_branch
      %64 = sbr.rel (0) target = $region21
    $region20: #{tpu_custom_call.1} parent=1 // pred_region
      %s66 = ssub.s32 2048, 2048
      %67 = vsyncadd [#allocation10], %s66
      %s68 = sshll.u32 [#allocation11], 4
      %s69 = int_to_ptr.vmem [resolvable:$true] %s68
      %74 = dma.hbm_to_vmem [thread:$0]  %s4, 2048, %s69, [#allocation10], 128, 128, 8
    $region21: #{tpu_custom_call.1} parent=1 // pred_fallthru
      _
    // Predicated region
    $region22: #{tpu_custom_call.1} parent=1 // pred_check
      _
    $region23: #{tpu_custom_call.1} parent=1 // pred_check_branch
      %76 = sbr.rel (0) target = $region25
    $region24: #{tpu_custom_call.1} parent=1 // pred_region
      %s78 = ssub.s32 1024, 1024
      %79 = vsyncadd [#allocation13], %s78
      %s80 = sshll.u32 [#allocation12], 4
      %s81 = int_to_ptr.vmem [resolvable:$true] %s80
      %86 = dma.hbm_to_vmem [thread:$0]  %s5, 1024, %s81, [#allocation13], 64, 64, 4
    $region25: #{tpu_custom_call.1} parent=1 // pred_fallthru
      _
    // Predicated region
    $region26: #{tpu_custom_call.1} parent=1 // pred_check
      _
    $region27: #{tpu_custom_call.1} parent=1 // pred_check_branch
      %88 = sbr.rel (0) target = $region29
    $region28: #{tpu_custom_call.1} parent=1 // pred_region
      %s90 = ssub.s32 1024, 1024
      %91 = vsyncadd [#allocation13], %s90
      %s92 = sshll.u32 [#allocation14], 4
      %s93 = int_to_ptr.vmem [resolvable:$true] %s92
      %98 = dma.hbm_to_vmem [thread:$0]  %s6, 1024, %s93, [#allocation13], 64, 64, 4
    $region29: #{tpu_custom_call.1} parent=1 // pred_fallthru
      _
    // Predicated region
    $region30: #{tpu_custom_call.1} parent=1 // pred_check
      _
    $region31: #{tpu_custom_call.1} parent=1 // pred_check_branch
      %100 = sbr.rel (0) target = $region33
    $region32: #{tpu_custom_call.1} parent=1 // pred_region
      _
    $region33: #{tpu_custom_call.1} parent=1 // pred_fallthru
      _
    // Predicated region
    $region34: #{tpu_custom_call.1} parent=1 // pred_check
      _
    $region35: #{tpu_custom_call.1} parent=1 // pred_check_branch
      %102 = sbr.rel (0) target = $region37
    $region36: #{tpu_custom_call.1} parent=1 // pred_region
      _
    $region37: #{tpu_custom_call.1} parent=1 // pred_fallthru
      _
    // Predicated region
    $region38: #{tpu_custom_call.1} parent=1 // pred_check
      _
    $region39: #{tpu_custom_call.1} parent=1 // pred_check_branch
      %104 = sbr.rel (0) target = $region41
    $region40: #{tpu_custom_call.1} parent=1 // pred_region
      %105 = dma.done [#allocation4], 64
    $region41: #{tpu_custom_call.1} parent=1 // pred_fallthru
      _
    // Predicated region
    $region42: #{tpu_custom_call.1} parent=1 // pred_check
      _
    $region43: #{tpu_custom_call.1} parent=1 // pred_check_branch
      %107 = sbr.rel (0) target = $region45
    $region44: #{tpu_custom_call.1} parent=1 // pred_region
      %108 = dma.done [#allocation7], 128
    $region45: #{tpu_custom_call.1} parent=1 // pred_fallthru
      _
    // Predicated region
    $region46: #{tpu_custom_call.1} parent=1 // pred_check
      _
    $region47: #{tpu_custom_call.1} parent=1 // pred_check_branch
      %110 = sbr.rel (0) target = $region49
    $region48: #{tpu_custom_call.1} parent=1 // pred_region
      %111 = dma.done [#allocation7], 1024
    $region49: #{tpu_custom_call.1} parent=1 // pred_fallthru
      _
    // Predicated region
    $region50: #{tpu_custom_call.1} parent=1 // pred_check
      _
    $region51: #{tpu_custom_call.1} parent=1 // pred_check_branch
      %113 = sbr.rel (0) target = $region53
    $region52: #{tpu_custom_call.1} parent=1 // pred_region
      %114 = dma.done [#allocation10], 1024
    $region53: #{tpu_custom_call.1} parent=1 // pred_fallthru
      _
    // Predicated region
    $region54: #{tpu_custom_call.1} parent=1 // pred_check
      _
    $region55: #{tpu_custom_call.1} parent=1 // pred_check_branch
      %116 = sbr.rel (0) target = $region57
    $region56: #{tpu_custom_call.1} parent=1 // pred_region
      %117 = dma.done [#allocation10], 2048
    $region57: #{tpu_custom_call.1} parent=1 // pred_fallthru
      _
    // Predicated region
    $region58: #{tpu_custom_call.1} parent=1 // pred_check
      _
    $region59: #{tpu_custom_call.1} parent=1 // pred_check_branch
      %119 = sbr.rel (0) target = $region61
    $region60: #{tpu_custom_call.1} parent=1 // pred_region
      %120 = dma.done [#allocation13], 1024
    $region61: #{tpu_custom_call.1} parent=1 // pred_fallthru
      _
    // Predicated region
    $region62: #{tpu_custom_call.1} parent=1 // pred_check
      _
    $region63: #{tpu_custom_call.1} parent=1 // pred_check_branch
      %122 = sbr.rel (0) target = $region65
    $region64: #{tpu_custom_call.1} parent=1 // pred_region
      %123 = dma.done [#allocation13], 1024
    $region65: #{tpu_custom_call.1} parent=1 // pred_fallthru
      _
    %p125 = scmp.eq.s32.totalorder 0, 0
    // Predicated region
    $region66: #{tpu_custom_call.1} parent=1 // pred_check
      %p126 = pneg %p125
    $region67: #{tpu_custom_call.1} parent=1 // pred_check_branch
      %128 = sbr.rel (%p126) target = $region69
    $region68: #{tpu_custom_call.1} parent=1 // pred_region
      %v129 = vld [vmem:[#allocation6] sm:$0xff]
      %130 = vst [vmem:[#allocation2] sm:$0xff] %v129
    $region69: #{tpu_custom_call.1} parent=1 // pred_fallthru
      _
    %v131 = vld [vmem:[#allocation2] sm:$0xff]
    %v132 = vpack.c.bf16 %v131, %v131
    %v133 = vld [vmem:[#allocation3] sm:$0xf]
    %v134 = vld [vmem:[#allocation8] sm:$0xf]
    %v135 = vld [vmem:[#allocation8 + $0x4] sm:$0xf]
    %v136 = vld [vmem:[#allocation8 + $0x8] sm:$0xf]
    %v137 = vld [vmem:[#allocation8 + $0xc] sm:$0xf]
    %v138 = vld [vmem:[#allocation8 + $0x10] sm:$0xf]
    %v139 = vld [vmem:[#allocation8 + $0x14] sm:$0xf]
    %v140 = vld [vmem:[#allocation8 + $0x18] sm:$0xf]
    %v141 = vld [vmem:[#allocation8 + $0x1c] sm:$0xf]
    %v142 = vld [vmem:[#allocation8 + $0x20] sm:$0xf]
    %v143 = vld [vmem:[#allocation8 + $0x24] sm:$0xf]
    %v144 = vld [vmem:[#allocation8 + $0x28] sm:$0xf]
    %v145 = vld [vmem:[#allocation8 + $0x2c] sm:$0xf]
    %v146 = vld [vmem:[#allocation8 + $0x30] sm:$0xf]
    %v147 = vld [vmem:[#allocation8 + $0x34] sm:$0xf]
    %v148 = vld [vmem:[#allocation8 + $0x38] sm:$0xf]
    %v149 = vld [vmem:[#allocation8 + $0x3c] sm:$0xf]
    %v150 = vld [vmem:[#allocation9] sm:$0xf]
    %v151 = vld [vmem:[#allocation9 + $0x4] sm:$0xf]
    %v152 = vld [vmem:[#allocation9 + $0x8] sm:$0xf]
    %v153 = vld [vmem:[#allocation9 + $0xc] sm:$0xf]
    %v154 = vld [vmem:[#allocation9 + $0x10] sm:$0xf]
    %v155 = vld [vmem:[#allocation9 + $0x14] sm:$0xf]
    %v156 = vld [vmem:[#allocation9 + $0x18] sm:$0xf]
    %v157 = vld [vmem:[#allocation9 + $0x1c] sm:$0xf]
    %v158 = vld [vmem:[#allocation9 + $0x20] sm:$0xf]
    %v159 = vld [vmem:[#allocation9 + $0x24] sm:$0xf]
    %v160 = vld [vmem:[#allocation9 + $0x28] sm:$0xf]
    %v161 = vld [vmem:[#allocation9 + $0x2c] sm:$0xf]
    %v162 = vld [vmem:[#allocation9 + $0x30] sm:$0xf]
    %v163 = vld [vmem:[#allocation9 + $0x34] sm:$0xf]
    %v164 = vld [vmem:[#allocation9 + $0x38] sm:$0xf]
    %v165 = vld [vmem:[#allocation9 + $0x3c] sm:$0xf]
    %v182 = vunpack.c.l.b16 %v150
    %v183 = vunpack.c.l.b16 %v151
    %v184 = vunpack.c.l.b16 %v152
    %v185 = vunpack.c.l.b16 %v153
    %v186 = vunpack.c.l.b16 %v154
    %v187 = vunpack.c.l.b16 %v155
    %v188 = vunpack.c.l.b16 %v156
    %v189 = vunpack.c.l.b16 %v157
    %v190 = vunpack.c.l.b16 %v158
    %v191 = vunpack.c.l.b16 %v159
    %v192 = vunpack.c.l.b16 %v160
    %v193 = vunpack.c.l.b16 %v161
    %v194 = vunpack.c.l.b16 %v162
    %v195 = vunpack.c.l.b16 %v163
    %v196 = vunpack.c.l.b16 %v164
    %v197 = vunpack.c.l.b16 %v165
    %v198 = vpack.c.b16 %v183, %v182
    %v199 = vpack.c.b16 %v185, %v184
    %v200 = vpack.c.b16 %v187, %v186
    %v201 = vpack.c.b16 %v189, %v188
    %v202 = vpack.c.b16 %v191, %v190
    %v203 = vpack.c.b16 %v193, %v192
    %v204 = vpack.c.b16 %v195, %v194
    %v205 = vpack.c.b16 %v197, %v196
    %214 = vmatprep.subr.bf16.mxu0 0
    %215 = vmatpush1.bf16.msra.mxu0 %v198
    %216 = vmatprep.subr.bf16.mxu0 0
    %217 = vmatpush1.bf16.msra.mxu0 %v199
    %218 = vmatprep.subr.bf16.mxu0 0
    %219 = vmatpush1.bf16.msra.mxu0 %v200
    %220 = vmatprep.subr.bf16.mxu0 0
    %221 = vmatpush1.bf16.msra.mxu0 %v201
    %222 = vmatprep.subr.bf16.mxu0 0
    %223 = vmatpush1.bf16.msra.mxu0 %v202
    %224 = vmatprep.subr.bf16.mxu0 0
    %225 = vmatpush1.bf16.msra.mxu0 %v203
    %226 = vmatprep.subr.bf16.mxu0 0
    %227 = vmatpush1.bf16.msra.mxu0 %v204
    %228 = vmatprep.subr.bf16.mxu0 0
    %229 = vmatpush1.bf16.msra.mxu0 %v205
    %230 = vmatprep.subr.bf16.mxu0 0
    %231 = vmatpush1.bf16.msra.mxu0 0
    %232 = vmatprep.subr.bf16.mxu0 0
    %233 = vmatpush1.bf16.msra.mxu0 0
    %234 = vmatprep.subr.bf16.mxu0 0
    %235 = vmatpush1.bf16.msra.mxu0 0
    %236 = vmatprep.subr.bf16.mxu0 0
    %237 = vmatpush1.bf16.msra.mxu0 0
    %238 = vmatprep.subr.bf16.mxu0 0
    %239 = vmatpush1.bf16.msra.mxu0 0
    %240 = vmatprep.subr.bf16.mxu0 0
    %241 = vmatpush1.bf16.msra.mxu0 0
    %242 = vmatprep.subr.bf16.mxu0 0
    %243 = vmatpush1.bf16.msra.mxu0 0
    %244 = vmatprep.subr.bf16.mxu0 0
    %245 = vmatpush1.bf16.msra.mxu0 0
    %246 = vmatprep.mubr.bf16.mxu0 0
    %247 = vmatmul.mubr.bf16.gmra.mrb[0].mxu0 %v132
    %v248 = vpop.f32.mrb[0].mxu0
    %v249 = vadd.f32 0.0, %v248
    %v250 = vpop.f32.mrb[0].mxu0
    %v251 = vpop.f32.mrb[0].mxu0
    %v252 = vpop.f32.mrb[0].mxu0
    %253 = vdwg.mxu0
    %v270 = vunpack.c.l.b16 %v134
    %v271 = vunpack.c.l.b16 %v135
    %v272 = vunpack.c.l.b16 %v136
    %v273 = vunpack.c.l.b16 %v137
    %v274 = vunpack.c.l.b16 %v138
    %v275 = vunpack.c.l.b16 %v139
    %v276 = vunpack.c.l.b16 %v140
    %v277 = vunpack.c.l.b16 %v141
    %v278 = vunpack.c.l.b16 %v142
    %v279 = vunpack.c.l.b16 %v143
    %v280 = vunpack.c.l.b16 %v144
    %v281 = vunpack.c.l.b16 %v145
    %v282 = vunpack.c.l.b16 %v146
    %v283 = vunpack.c.l.b16 %v147
    %v284 = vunpack.c.l.b16 %v148
    %v285 = vunpack.c.l.b16 %v149
    %v286 = vpack.c.b16 %v271, %v270
    %v287 = vpack.c.b16 %v273, %v272
    %v288 = vpack.c.b16 %v275, %v274
    %v289 = vpack.c.b16 %v277, %v276
    %v290 = vpack.c.b16 %v279, %v278
    %v291 = vpack.c.b16 %v281, %v280
    %v292 = vpack.c.b16 %v283, %v282
    %v293 = vpack.c.b16 %v285, %v284
    %302 = vmatprep.subr.bf16.mxu0 0
    %303 = vmatpush1.bf16.msra.mxu0 %v286
    %304 = vmatprep.subr.bf16.mxu0 0
    %305 = vmatpush1.bf16.msra.mxu0 %v287
    %306 = vmatprep.subr.bf16.mxu0 0
    %307 = vmatpush1.bf16.msra.mxu0 %v288
    %308 = vmatprep.subr.bf16.mxu0 0
    %309 = vmatpush1.bf16.msra.mxu0 %v289
    %310 = vmatprep.subr.bf16.mxu0 0
    %311 = vmatpush1.bf16.msra.mxu0 %v290
    %312 = vmatprep.subr.bf16.mxu0 0
    %313 = vmatpush1.bf16.msra.mxu0 %v291
    %314 = vmatprep.subr.bf16.mxu0 0
    %315 = vmatpush1.bf16.msra.mxu0 %v292
    %316 = vmatprep.subr.bf16.mxu0 0
    %317 = vmatpush1.bf16.msra.mxu0 %v293
    %318 = vmatprep.subr.bf16.mxu0 0
    %319 = vmatpush1.bf16.msra.mxu0 0
    %320 = vmatprep.subr.bf16.mxu0 0
    %321 = vmatpush1.bf16.msra.mxu0 0
    %322 = vmatprep.subr.bf16.mxu0 0
    %323 = vmatpush1.bf16.msra.mxu0 0
    %324 = vmatprep.subr.bf16.mxu0 0
    %325 = vmatpush1.bf16.msra.mxu0 0
    %326 = vmatprep.subr.bf16.mxu0 0
    %327 = vmatpush1.bf16.msra.mxu0 0
    %328 = vmatprep.subr.bf16.mxu0 0
    %329 = vmatpush1.bf16.msra.mxu0 0
    %330 = vmatprep.subr.bf16.mxu0 0
    %331 = vmatpush1.bf16.msra.mxu0 0
    %332 = vmatprep.subr.bf16.mxu0 0
    %333 = vmatpush1.bf16.msra.mxu0 0
    %334 = vmatprep.mubr.bf16.mxu0 0
    %335 = vmatmul.mubr.bf16.gmra.mrb[0].mxu0 %v133
    %v336 = vpop.f32.mrb[0].mxu0
    %v337 = vadd.f32 %v249, %v336
    %v338 = vpop.f32.mrb[0].mxu0
    %v339 = vpop.f32.mrb[0].mxu0
    %v340 = vpop.f32.mrb[0].mxu0
    %341 = vdwg.mxu0
    %v342 = vld [vmem:[%s7] sm:$0x1]
    %v344 = vlaneseq
    %v345 = vshrl.u32 %v344, 7
    %v346 = vsub.s32 0, %v345
    %v347 = vrot.slane %v342, %v346
    %v349 = vadd.f32 %v337, %v347
    %v350 = vxor.u32 %v349, 2147483648
    %v351 = vmul.f32 %v350, 1.442695
    %v352 = vpow.pop %v351
    %v353 = vadd.f32 %v352, 1.0
    %v354 = vrcp.pop %v353
    %v355 = vmul.f32 1.0, %v354
    %v356 = vmul.f32 %v355, %v131
    %v357 = vpack.c.bf16 %v356, %v356
    %v358 = vld [vmem:[#allocation11] sm:$0xff]
    %v359 = vld [vmem:[#allocation11 + $0x8] sm:$0xff]
    %v360 = vld [vmem:[#allocation11 + $0x10] sm:$0xff]
    %v361 = vld [vmem:[#allocation11 + $0x18] sm:$0xff]
    %v362 = vld [vmem:[#allocation11 + $0x20] sm:$0xff]
    %v363 = vld [vmem:[#allocation11 + $0x28] sm:$0xff]
    %v364 = vld [vmem:[#allocation11 + $0x30] sm:$0xff]
    %v365 = vld [vmem:[#allocation11 + $0x38] sm:$0xff]
    %v366 = vld [vmem:[#allocation11 + $0x40] sm:$0xff]
    %v367 = vld [vmem:[#allocation11 + $0x48] sm:$0xff]
    %v368 = vld [vmem:[#allocation11 + $0x50] sm:$0xff]
    %v369 = vld [vmem:[#allocation11 + $0x58] sm:$0xff]
    %v370 = vld [vmem:[#allocation11 + $0x60] sm:$0xff]
    %v371 = vld [vmem:[#allocation11 + $0x68] sm:$0xff]
    %v372 = vld [vmem:[#allocation11 + $0x70] sm:$0xff]
    %v373 = vld [vmem:[#allocation11 + $0x78] sm:$0xff]
    %v374 = vld [vmem:[%s8] sm:$0x3]
    %v376 = vlaneseq
    %v377 = vshrl.u32 %v376, 7
    %v378 = vsub.s32 0, %v377
    %v379 = vrot.slane %v374, %v378
    %v380 = vlaneseq
    %v381 = vshrl.u32 %v380, 7
    %v382 = vsub.s32 1, %v381
    %v383 = vrot.slane %v374, %v382
    %v402 = vunpack.c.l.b16 %v358
    %v403 = vunpack.c.h.b16 %v358
    %v404 = vunpack.c.l.b16 %v359
    %v405 = vunpack.c.h.b16 %v359
    %v406 = vunpack.c.l.b16 %v360
    %v407 = vunpack.c.h.b16 %v360
    %v408 = vunpack.c.l.b16 %v361
    %v409 = vunpack.c.h.b16 %v361
    %v410 = vunpack.c.l.b16 %v362
    %v411 = vunpack.c.h.b16 %v362
    %v412 = vunpack.c.l.b16 %v363
    %v413 = vunpack.c.h.b16 %v363
    %v414 = vunpack.c.l.b16 %v364
    %v415 = vunpack.c.h.b16 %v364
    %v416 = vunpack.c.l.b16 %v365
    %v417 = vunpack.c.h.b16 %v365
    %v418 = vunpack.c.l.b16 %v366
    %v419 = vunpack.c.h.b16 %v366
    %v420 = vunpack.c.l.b16 %v367
    %v421 = vunpack.c.h.b16 %v367
    %v422 = vunpack.c.l.b16 %v368
    %v423 = vunpack.c.h.b16 %v368
    %v424 = vunpack.c.l.b16 %v369
    %v425 = vunpack.c.h.b16 %v369
    %v426 = vunpack.c.l.b16 %v370
    %v427 = vunpack.c.h.b16 %v370
    %v428 = vunpack.c.l.b16 %v371
    %v429 = vunpack.c.h.b16 %v371
    %v430 = vunpack.c.l.b16 %v372
    %v431 = vunpack.c.h.b16 %v372
    %v432 = vunpack.c.l.b16 %v373
    %v433 = vunpack.c.h.b16 %v373
    %v434 = vpack.c.b16 %v404, %v402
    %v435 = vpack.c.b16 %v405, %v403
    %v436 = vpack.c.b16 %v408, %v406
    %v437 = vpack.c.b16 %v409, %v407
    %v438 = vpack.c.b16 %v412, %v410
    %v439 = vpack.c.b16 %v413, %v411
    %v440 = vpack.c.b16 %v416, %v414
    %v441 = vpack.c.b16 %v417, %v415
    %v442 = vpack.c.b16 %v420, %v418
    %v443 = vpack.c.b16 %v421, %v419
    %v444 = vpack.c.b16 %v424, %v422
    %v445 = vpack.c.b16 %v425, %v423
    %v446 = vpack.c.b16 %v428, %v426
    %v447 = vpack.c.b16 %v429, %v427
    %v448 = vpack.c.b16 %v432, %v430
    %v449 = vpack.c.b16 %v433, %v431
    %466 = vmatprep.subr.bf16.mxu0 %v435
    %467 = vmatpush1.bf16.msra.mxu0 %v434
    %468 = vmatprep.subr.bf16.mxu0 %v437
    %469 = vmatpush1.bf16.msra.mxu0 %v436
    %470 = vmatprep.subr.bf16.mxu0 %v439
    %471 = vmatpush1.bf16.msra.mxu0 %v438
    %472 = vmatprep.subr.bf16.mxu0 %v441
    %473 = vmatpush1.bf16.msra.mxu0 %v440
    %474 = vmatprep.subr.bf16.mxu0 %v443
    %475 = vmatpush1.bf16.msra.mxu0 %v442
    %476 = vmatprep.subr.bf16.mxu0 %v445
    %477 = vmatpush1.bf16.msra.mxu0 %v444
    %478 = vmatprep.subr.bf16.mxu0 %v447
    %479 = vmatpush1.bf16.msra.mxu0 %v446
    %480 = vmatprep.subr.bf16.mxu0 %v449
    %481 = vmatpush1.bf16.msra.mxu0 %v448
    %482 = vmatprep.subr.bf16.mxu0 0
    %483 = vmatpush1.bf16.msra.mxu0 0
    %484 = vmatprep.subr.bf16.mxu0 0
    %485 = vmatpush1.bf16.msra.mxu0 0
    %486 = vmatprep.subr.bf16.mxu0 0
    %487 = vmatpush1.bf16.msra.mxu0 0
    %488 = vmatprep.subr.bf16.mxu0 0
    %489 = vmatpush1.bf16.msra.mxu0 0
    %490 = vmatprep.subr.bf16.mxu0 0
    %491 = vmatpush1.bf16.msra.mxu0 0
    %492 = vmatprep.subr.bf16.mxu0 0
    %493 = vmatpush1.bf16.msra.mxu0 0
    %494 = vmatprep.subr.bf16.mxu0 0
    %495 = vmatpush1.bf16.msra.mxu0 0
    %496 = vmatprep.subr.bf16.mxu0 0
    %497 = vmatpush1.bf16.msra.mxu0 0
    %498 = vmatprep.mubr.bf16.mxu0 0
    %499 = vmatmul.mubr.bf16.gmra.mrb[0].mxu0 %v133
    %v500 = vpop.f32.mrb[0].mxu0
    %v501 = vadd.f32 %v379, %v500
    %v502 = vpop.f32.mrb[0].mxu0
    %v503 = vadd.f32 %v383, %v502
    %v504 = vpop.f32.mrb[0].mxu0
    %v505 = vpop.f32.mrb[0].mxu0
    %506 = vdwg.mxu0
    %v507 = vld [vmem:[#allocation12] sm:$0xf]
    %v508 = vld [vmem:[#allocation12 + $0x4] sm:$0xf]
    %v509 = vld [vmem:[#allocation12 + $0x8] sm:$0xf]
    %v510 = vld [vmem:[#allocation12 + $0xc] sm:$0xf]
    %v511 = vld [vmem:[#allocation12 + $0x10] sm:$0xf]
    %v512 = vld [vmem:[#allocation12 + $0x14] sm:$0xf]
    %v513 = vld [vmem:[#allocation12 + $0x18] sm:$0xf]
    %v514 = vld [vmem:[#allocation12 + $0x1c] sm:$0xf]
    %v515 = vld [vmem:[#allocation12 + $0x20] sm:$0xf]
    %v516 = vld [vmem:[#allocation12 + $0x24] sm:$0xf]
    %v517 = vld [vmem:[#allocation12 + $0x28] sm:$0xf]
    %v518 = vld [vmem:[#allocation12 + $0x2c] sm:$0xf]
    %v519 = vld [vmem:[#allocation12 + $0x30] sm:$0xf]
    %v520 = vld [vmem:[#allocation12 + $0x34] sm:$0xf]
    %v521 = vld [vmem:[#allocation12 + $0x38] sm:$0xf]
    %v522 = vld [vmem:[#allocation12 + $0x3c] sm:$0xf]
    %v539 = vunpack.c.l.b16 %v507
    %v540 = vunpack.c.l.b16 %v508
    %v541 = vunpack.c.l.b16 %v509
    %v542 = vunpack.c.l.b16 %v510
    %v543 = vunpack.c.l.b16 %v511
    %v544 = vunpack.c.l.b16 %v512
    %v545 = vunpack.c.l.b16 %v513
    %v546 = vunpack.c.l.b16 %v514
    %v547 = vunpack.c.l.b16 %v515
    %v548 = vunpack.c.l.b16 %v516
    %v549 = vunpack.c.l.b16 %v517
    %v550 = vunpack.c.l.b16 %v518
    %v551 = vunpack.c.l.b16 %v519
    %v552 = vunpack.c.l.b16 %v520
    %v553 = vunpack.c.l.b16 %v521
    %v554 = vunpack.c.l.b16 %v522
    %v555 = vpack.c.b16 %v540, %v539
    %v556 = vpack.c.b16 %v542, %v541
    %v557 = vpack.c.b16 %v544, %v543
    %v558 = vpack.c.b16 %v546, %v545
    %v559 = vpack.c.b16 %v548, %v547
    %v560 = vpack.c.b16 %v550, %v549
    %v561 = vpack.c.b16 %v552, %v551
    %v562 = vpack.c.b16 %v554, %v553
    %571 = vmatprep.subr.bf16.mxu0 0
    %572 = vmatpush1.bf16.msra.mxu0 %v555
    %573 = vmatprep.subr.bf16.mxu0 0
    %574 = vmatpush1.bf16.msra.mxu0 %v556
    %575 = vmatprep.subr.bf16.mxu0 0
    %576 = vmatpush1.bf16.msra.mxu0 %v557
    %577 = vmatprep.subr.bf16.mxu0 0
    %578 = vmatpush1.bf16.msra.mxu0 %v558
    %579 = vmatprep.subr.bf16.mxu0 0
    %580 = vmatpush1.bf16.msra.mxu0 %v559
    %581 = vmatprep.subr.bf16.mxu0 0
    %582 = vmatpush1.bf16.msra.mxu0 %v560
    %583 = vmatprep.subr.bf16.mxu0 0
    %584 = vmatpush1.bf16.msra.mxu0 %v561
    %585 = vmatprep.subr.bf16.mxu0 0
    %586 = vmatpush1.bf16.msra.mxu0 %v562
    %587 = vmatprep.subr.bf16.mxu0 0
    %588 = vmatpush1.bf16.msra.mxu0 0
    %589 = vmatprep.subr.bf16.mxu0 0
    %590 = vmatpush1.bf16.msra.mxu0 0
    %591 = vmatprep.subr.bf16.mxu0 0
    %592 = vmatpush1.bf16.msra.mxu0 0
    %593 = vmatprep.subr.bf16.mxu0 0
    %594 = vmatpush1.bf16.msra.mxu0 0
    %595 = vmatprep.subr.bf16.mxu0 0
    %596 = vmatpush1.bf16.msra.mxu0 0
    %597 = vmatprep.subr.bf16.mxu0 0
    %598 = vmatpush1.bf16.msra.mxu0 0
    %599 = vmatprep.subr.bf16.mxu0 0
    %600 = vmatpush1.bf16.msra.mxu0 0
    %601 = vmatprep.subr.bf16.mxu0 0
    %602 = vmatpush1.bf16.msra.mxu0 0
    %603 = vmatprep.mubr.bf16.mxu0 0
    %604 = vmatmul.mubr.bf16.gmra.mrb[0].mxu0 %v132
    %v605 = vpop.f32.mrb[0].mxu0
    %v606 = vadd.f32 0.0, %v605
    %v607 = vpop.f32.mrb[0].mxu0
    %v608 = vpop.f32.mrb[0].mxu0
    %v609 = vpop.f32.mrb[0].mxu0
    %610 = vdwg.mxu0
    %v611 = vadd.f32 %v501, %v606
    %v612 = vxor.u32 %v611, 2147483648
    %v613 = vmul.f32 %v612, 1.442695
    %v614 = vpow.pop %v613
    %v615 = vadd.f32 %v614, 1.0
    %v616 = vrcp.pop %v615
    %v617 = vmul.f32 1.0, %v616
    %v618 = vld [vmem:[#allocation14] sm:$0xf]
    %v619 = vld [vmem:[#allocation14 + $0x4] sm:$0xf]
    %v620 = vld [vmem:[#allocation14 + $0x8] sm:$0xf]
    %v621 = vld [vmem:[#allocation14 + $0xc] sm:$0xf]
    %v622 = vld [vmem:[#allocation14 + $0x10] sm:$0xf]
    %v623 = vld [vmem:[#allocation14 + $0x14] sm:$0xf]
    %v624 = vld [vmem:[#allocation14 + $0x18] sm:$0xf]
    %v625 = vld [vmem:[#allocation14 + $0x1c] sm:$0xf]
    %v626 = vld [vmem:[#allocation14 + $0x20] sm:$0xf]
    %v627 = vld [vmem:[#allocation14 + $0x24] sm:$0xf]
    %v628 = vld [vmem:[#allocation14 + $0x28] sm:$0xf]
    %v629 = vld [vmem:[#allocation14 + $0x2c] sm:$0xf]
    %v630 = vld [vmem:[#allocation14 + $0x30] sm:$0xf]
    %v631 = vld [vmem:[#allocation14 + $0x34] sm:$0xf]
    %v632 = vld [vmem:[#allocation14 + $0x38] sm:$0xf]
    %v633 = vld [vmem:[#allocation14 + $0x3c] sm:$0xf]
    %v650 = vunpack.c.l.b16 %v618
    %v651 = vunpack.c.l.b16 %v619
    %v652 = vunpack.c.l.b16 %v620
    %v653 = vunpack.c.l.b16 %v621
    %v654 = vunpack.c.l.b16 %v622
    %v655 = vunpack.c.l.b16 %v623
    %v656 = vunpack.c.l.b16 %v624
    %v657 = vunpack.c.l.b16 %v625
    %v658 = vunpack.c.l.b16 %v626
    %v659 = vunpack.c.l.b16 %v627
    %v660 = vunpack.c.l.b16 %v628
    %v661 = vunpack.c.l.b16 %v629
    %v662 = vunpack.c.l.b16 %v630
    %v663 = vunpack.c.l.b16 %v631
    %v664 = vunpack.c.l.b16 %v632
    %v665 = vunpack.c.l.b16 %v633
    %v666 = vpack.c.b16 %v651, %v650
    %v667 = vpack.c.b16 %v653, %v652
    %v668 = vpack.c.b16 %v655, %v654
    %v669 = vpack.c.b16 %v657, %v656
    %v670 = vpack.c.b16 %v659, %v658
    %v671 = vpack.c.b16 %v661, %v660
    %v672 = vpack.c.b16 %v663, %v662
    %v673 = vpack.c.b16 %v665, %v664
    %682 = vmatprep.subr.bf16.mxu0 0
    %683 = vmatpush1.bf16.msra.mxu0 %v666
    %684 = vmatprep.subr.bf16.mxu0 0
    %685 = vmatpush1.bf16.msra.mxu0 %v667
    %686 = vmatprep.subr.bf16.mxu0 0
    %687 = vmatpush1.bf16.msra.mxu0 %v668
    %688 = vmatprep.subr.bf16.mxu0 0
    %689 = vmatpush1.bf16.msra.mxu0 %v669
    %690 = vmatprep.subr.bf16.mxu0 0
    %691 = vmatpush1.bf16.msra.mxu0 %v670
    %692 = vmatprep.subr.bf16.mxu0 0
    %693 = vmatpush1.bf16.msra.mxu0 %v671
    %694 = vmatprep.subr.bf16.mxu0 0
    %695 = vmatpush1.bf16.msra.mxu0 %v672
    %696 = vmatprep.subr.bf16.mxu0 0
    %697 = vmatpush1.bf16.msra.mxu0 %v673
    %698 = vmatprep.subr.bf16.mxu0 0
    %699 = vmatpush1.bf16.msra.mxu0 0
    %700 = vmatprep.subr.bf16.mxu0 0
    %701 = vmatpush1.bf16.msra.mxu0 0
    %702 = vmatprep.subr.bf16.mxu0 0
    %703 = vmatpush1.bf16.msra.mxu0 0
    %704 = vmatprep.subr.bf16.mxu0 0
    %705 = vmatpush1.bf16.msra.mxu0 0
    %706 = vmatprep.subr.bf16.mxu0 0
    %707 = vmatpush1.bf16.msra.mxu0 0
    %708 = vmatprep.subr.bf16.mxu0 0
    %709 = vmatpush1.bf16.msra.mxu0 0
    %710 = vmatprep.subr.bf16.mxu0 0
    %711 = vmatpush1.bf16.msra.mxu0 0
    %712 = vmatprep.subr.bf16.mxu0 0
    %713 = vmatpush1.bf16.msra.mxu0 0
    %714 = vmatprep.mubr.bf16.mxu0 0
    %715 = vmatmul.mubr.bf16.gmra.mrb[0].mxu0 %v357
    %v716 = vpop.f32.mrb[0].mxu0
    %v717 = vadd.f32 0.0, %v716
    %v718 = vpop.f32.mrb[0].mxu0
    %v719 = vpop.f32.mrb[0].mxu0
    %v720 = vpop.f32.mrb[0].mxu0
    %721 = vdwg.mxu0
    %v722 = vadd.f32 %v503, %v717
    %v723 = vtanh.pop %v722
    %v724 = vsub.f32 %v131, %v723
    %v725 = vmul.f32 %v617, %v724
    %v726 = vadd.f32 %v723, %v725
    %727 = vst [vmem:[#allocation2] sm:$0xff] %v726
    %728 = vst [vmem:[#allocation15] sm:$0xff] %v726
    // Predicated region
    $region70: #{tpu_custom_call.1} parent=1 // pred_check
      _
    $region71: #{tpu_custom_call.1} parent=1 // pred_check_branch
      %730 = sbr.rel (0) target = $region73
    $region72: #{tpu_custom_call.1} parent=1 // pred_region
      %s732 = ssub.s32 128, 128
      %733 = vsyncadd [#allocation5], %s732
      %s735 = sshll.u32 [#allocation15], 4
      %s736 = int_to_ptr.vmem [resolvable:$true] %s735
      %738 = dma.vmem_to_hbm [thread:$0]  %s736, 128, %s9, [#allocation5]
    $region73: #{tpu_custom_call.1} parent=1 // pred_fallthru
      _
    // Predicated region
    $region74: #{tpu_custom_call.1} parent=1 // pred_check
      _
    $region75: #{tpu_custom_call.1} parent=1 // pred_check_branch
      %740 = sbr.rel (0) target = $region77
    $region76: #{tpu_custom_call.1} parent=1 // pred_region
      %741 = dma.done [#allocation5], 128
    $region77: #{tpu_custom_call.1} parent=1 // pred_fallthru
      _
    %742 = vsyncpa [#allocation4], 1
    %743 = vsyncpa [#allocation7], 1
    %744 = vsyncpa [#allocation10], 1
    %745 = vsyncpa [#allocation13], 1
    %746 = vsyncpa [#allocation5], 1

// kernel: tpu_custom_call.1
$region0: #{tpu_custom_call.1}
  #allocation0 [shape = 'u32[]', space=smem, size = 0x4, offset = 0x4, fixed_abs, tag = 'smem constant byte address 0x4 - core index']
  #allocation1 [shape = 'u32[144,128]{1,0:T(1,128)}', space=vmem, size = 0x12000, scoped, tag = 'internal scratch']
  #allocation2 [shape = 'f32[8,128]{1,0:T(8,128)}', space=vmem, size = 0x1000, scoped, tag = 'scratch operand']
  %s0 = inlined_call_operand.hbm [shape: bf16[1,8,128], index: 0, kind: input, shape index: {}]
  %s1 = inlined_call_operand.hbm [shape: f32[8,128], index: 1, kind: input, shape index: {}]
  %s2 = inlined_call_operand.hbm [shape: bf16[128,128], index: 2, kind: input, shape index: {}]
  %s3 = inlined_call_operand.hbm [shape: bf16[128,128], index: 3, kind: input, shape index: {}]
  %s4 = inlined_call_operand.hbm [shape: bf16[128,256], index: 4, kind: input, shape index: {}]
  %s5 = inlined_call_operand.hbm [shape: bf16[128,128], index: 5, kind: input, shape index: {}]
  %s6 = inlined_call_operand.hbm [shape: bf16[128,128], index: 6, kind: input, shape index: {}]
  %s7 = inlined_call_operand.vmem [shape: f32[1,128], index: 7, kind: input, shape index: {}]
  %s8 = inlined_call_operand.vmem [shape: f32[1,256], index: 8, kind: input, shape index: {}]
  %s9 = inlined_call_operand.hbm [shape: f32[1,8,128], index: 9, kind: output, shape index: {}]
  %s10 = sld [smem:[#allocation0]]
  $region78: #{tpu_custom_call.1} parent=0
    _
  %s12 = ssub.s32 1, %s10
  %s13 = scalar_select 0, %s12, %s10
  $region1: #{tpu_custom_call.1} parent=0
    #allocation3 [shape = 'u8[2048]{0}', space=vmem, size = 0x800, scoped, tag = 'input window, operand 0, single buffered']
    #allocation4 [shape = 's32[1]{0}', space=sflag, size = 0x4, scoped, tag = 'scoped memory for tpu_custom_call.1']
    #allocation5 [shape = 's32[1]{0}', space=sflag, size = 0x4, scoped, tag = 'scoped memory for tpu_custom_call.1']
    #allocation6 [shape = 'u8[4096]{0}', space=vmem, size = 0x1000, scoped, tag = 'input window, operand 1, single buffered']
    #allocation7 [shape = 's32[1]{0}', space=sflag, size = 0x4, scoped, tag = 'scoped memory for tpu_custom_call.1']
    #allocation8 [shape = 'u8[32768]{0}', space=vmem, size = 0x8000, scoped, tag = 'input window, operand 2, single buffered']
    #allocation9 [shape = 'u8[32768]{0}', space=vmem, size = 0x8000, scoped, tag = 'input window, operand 3, single buffered']
    #allocation10 [shape = 's32[1]{0}', space=sflag, size = 0x4, scoped, tag = 'scoped memory for tpu_custom_call.1']
    #allocation11 [shape = 'u8[65536]{0}', space=vmem, size = 0x10000, scoped, tag = 'input window, operand 4, single buffered']
    #allocation12 [shape = 'u8[32768]{0}', space=vmem, size = 0x8000, scoped, tag = 'input window, operand 5, single buffered']
    #allocation13 [shape = 's32[1]{0}', space=sflag, size = 0x4, scoped, tag = 'scoped memory for tpu_custom_call.1']
    #allocation14 [shape = 'u8[32768]{0}', space=vmem, size = 0x8000, scoped, tag = 'input window, operand 6, single buffered']
    #allocation15 [shape = 'u8[4096]{0}', space=vmem, size = 0x1000, scoped, tag = 'output window, operand 0, single buffered']
    %14 = vsyncpa [#allocation4], 0
    %15 = vsyncpa [#allocation7], 0
    %16 = vsyncpa [#allocation10], 0
    %17 = vsyncpa [#allocation13], 0
    %18 = vsyncpa [#allocation5], 0
    // Predicated region
    $region2: #{tpu_custom_call.1} parent=1 // pred_check
      _
    $region3: #{tpu_custom_call.1} parent=1 // pred_check_branch
      %20 = sbr.rel (0) target = $region5
    $region4: #{tpu_custom_call.1} parent=1 // pred_region
      %s22 = ssub.s32 64, 64
      %23 = vsyncadd [#allocation4], %s22
      %s25 = sshll.u32 [#allocation3], 4
      %s26 = int_to_ptr.vmem [resolvable:$true] %s25
      %28 = dma.hbm_to_vmem [thread:$0]  %s0, 64, %s26, [#allocation4]
    $region5: #{tpu_custom_call.1} parent=1 // pred_fallthru
      _
    // Predicated region
    $region6: #{tpu_custom_call.1} parent=1 // pred_check
      _
    $region7: #{tpu_custom_call.1} parent=1 // pred_check_branch
      %30 = sbr.rel (0) target = $region9
    $region8: #{tpu_custom_call.1} parent=1 // pred_region
      %s32 = ssub.s32 128, 128
      %33 = vsyncadd [#allocation7], %s32
      %s35 = sshll.u32 [#allocation6], 4
      %s36 = int_to_ptr.vmem [resolvable:$true] %s35
      %38 = dma.hbm_to_vmem [thread:$0]  %s1, 128, %s36, [#allocation7]
    $region9: #{tpu_custom_call.1} parent=1 // pred_fallthru
      _
    // Predicated region
    $region10: #{tpu_custom_call.1} parent=1 // pred_check
      _
    $region11: #{tpu_custom_call.1} parent=1 // pred_check_branch
      %40 = sbr.rel (0) target = $region13
    $region12: #{tpu_custom_call.1} parent=1 // pred_region
      %s42 = ssub.s32 1024, 1024
      %43 = vsyncadd [#allocation7], %s42
      %s44 = sshll.u32 [#allocation8], 4
      %s45 = int_to_ptr.vmem [resolvable:$true] %s44
      %50 = dma.hbm_to_vmem [thread:$0]  %s2, 1024, %s45, [#allocation7], 64, 64, 4
    $region13: #{tpu_custom_call.1} parent=1 // pred_fallthru
      _
    // Predicated region
    $region14: #{tpu_custom_call.1} parent=1 // pred_check
      _
    $region15: #{tpu_custom_call.1} parent=1 // pred_check_branch
      %52 = sbr.rel (0) target = $region17
    $region16: #{tpu_custom_call.1} parent=1 // pred_region
      %s54 = ssub.s32 1024, 1024
      %55 = vsyncadd [#allocation10], %s54
      %s56 = sshll.u32 [#allocation9], 4
      %s57 = int_to_ptr.vmem [resolvable:$true] %s56
      %62 = dma.hbm_to_vmem [thread:$0]  %s3, 1024, %s57, [#allocation10], 64, 64, 4
    $region17: #{tpu_custom_call.1} parent=1 // pred_fallthru
      _
    // Predicated region
    $region18: #{tpu_custom_call.1} parent=1 // pred_check
      _
    $region19: #{tpu_custom_call.1} parent=1 // pred_check_branch
      %64 = sbr.rel (0) target = $region21
    $region20: #{tpu_custom_call.1} parent=1 // pred_region
      %s66 = ssub.s32 2048, 2048
      %67 = vsyncadd [#allocation10], %s66
      %s68 = sshll.u32 [#allocation11], 4
      %s69 = int_to_ptr.vmem [resolvable:$true] %s68
      %74 = dma.hbm_to_vmem [thread:$0]  %s4, 2048, %s69, [#allocation10], 128, 128, 8
    $region21: #{tpu_custom_call.1} parent=1 // pred_fallthru
      _
    // Predicated region
    $region22: #{tpu_custom_call.1} parent=1 // pred_check
      _
    $region23: #{tpu_custom_call.1} parent=1 // pred_check_branch
      %76 = sbr.rel (0) target = $region25
    $region24: #{tpu_custom_call.1} parent=1 // pred_region
      %s78 = ssub.s32 1024, 1024
      %79 = vsyncadd [#allocation13], %s78
      %s80 = sshll.u32 [#allocation12], 4
      %s81 = int_to_ptr.vmem [resolvable:$true] %s80
      %86 = dma.hbm_to_vmem [thread:$0]  %s5, 1024, %s81, [#allocation13], 64, 64, 4
    $region25: #{tpu_custom_call.1} parent=1 // pred_fallthru
      _
    // Predicated region
    $region26: #{tpu_custom_call.1} parent=1 // pred_check
      _
    $region27: #{tpu_custom_call.1} parent=1 // pred_check_branch
      %88 = sbr.rel (0) target = $region29
    $region28: #{tpu_custom_call.1} parent=1 // pred_region
      %s90 = ssub.s32 1024, 1024
      %91 = vsyncadd [#allocation13], %s90
      %s92 = sshll.u32 [#allocation14], 4
      %s93 = int_to_ptr.vmem [resolvable:$true] %s92
      %98 = dma.hbm_to_vmem [thread:$0]  %s6, 1024, %s93, [#allocation13], 64, 64, 4
    $region29: #{tpu_custom_call.1} parent=1 // pred_fallthru
      _
    // Predicated region
    $region30: #{tpu_custom_call.1} parent=1 // pred_check
      _
    $region31: #{tpu_custom_call.1} parent=1 // pred_check_branch
      %100 = sbr.rel (0) target = $region33
    $region32: #{tpu_custom_call.1} parent=1 // pred_region
      _
    $region33: #{tpu_custom_call.1} parent=1 // pred_fallthru
      _
    // Predicated region
    $region34: #{tpu_custom_call.1} parent=1 // pred_check
      _
    $region35: #{tpu_custom_call.1} parent=1 // pred_check_branch
      %102 = sbr.rel (0) target = $region37
    $region36: #{tpu_custom_call.1} parent=1 // pred_region
      _
    $region37: #{tpu_custom_call.1} parent=1 // pred_fallthru
      _
    // Predicated region
    $region38: #{tpu_custom_call.1} parent=1 // pred_check
      _
    $region39: #{tpu_custom_call.1} parent=1 // pred_check_branch
      %104 = sbr.rel (0) target = $region41
    $region40: #{tpu_custom_call.1} parent=1 // pred_region
      %105 = dma.done [#allocation4], 64
    $region41: #{tpu_custom_call.1} parent=1 // pred_fallthru
      _
    // Predicated region
    $region42: #{tpu_custom_call.1} parent=1 // pred_check
      _
    $region43: #{tpu_custom_call.1} parent=1 // pred_check_branch
      %107 = sbr.rel (0) target = $region45
    $region44: #{tpu_custom_call.1} parent=1 // pred_region
      %108 = dma.done [#allocation7], 128
    $region45: #{tpu_custom_call.1} parent=1 // pred_fallthru
      _
    // Predicated region
    $region46: #{tpu_custom_call.1} parent=1 // pred_check
      _
    $region47: #{tpu_custom_call.1} parent=1 // pred_check_branch
      %110 = sbr.rel (0) target = $region49
    $region48: #{tpu_custom_call.1} parent=1 // pred_region
      %111 = dma.done [#allocation7], 1024
    $region49: #{tpu_custom_call.1} parent=1 // pred_fallthru
      _
    // Predicated region
    $region50: #{tpu_custom_call.1} parent=1 // pred_check
      _
    $region51: #{tpu_custom_call.1} parent=1 // pred_check_branch
      %113 = sbr.rel (0) target = $region53
    $region52: #{tpu_custom_call.1} parent=1 // pred_region
      %114 = dma.done [#allocation10], 1024
    $region53: #{tpu_custom_call.1} parent=1 // pred_fallthru
      _
    // Predicated region
    $region54: #{tpu_custom_call.1} parent=1 // pred_check
      _
    $region55: #{tpu_custom_call.1} parent=1 // pred_check_branch
      %116 = sbr.rel (0) target = $region57
    $region56: #{tpu_custom_call.1} parent=1 // pred_region
      %117 = dma.done [#allocation10], 2048
    $region57: #{tpu_custom_call.1} parent=1 // pred_fallthru
      _
    // Predicated region
    $region58: #{tpu_custom_call.1} parent=1 // pred_check
      _
    $region59: #{tpu_custom_call.1} parent=1 // pred_check_branch
      %119 = sbr.rel (0) target = $region61
    $region60: #{tpu_custom_call.1} parent=1 // pred_region
      %120 = dma.done [#allocation13], 1024
    $region61: #{tpu_custom_call.1} parent=1 // pred_fallthru
      _
    // Predicated region
    $region62: #{tpu_custom_call.1} parent=1 // pred_check
      _
    $region63: #{tpu_custom_call.1} parent=1 // pred_check_branch
      %122 = sbr.rel (0) target = $region65
    $region64: #{tpu_custom_call.1} parent=1 // pred_region
      %123 = dma.done [#allocation13], 1024
    $region65: #{tpu_custom_call.1} parent=1 // pred_fallthru
      _
    %p125 = scmp.eq.s32.totalorder 0, 0
    // Predicated region
    $region66: #{tpu_custom_call.1} parent=1 // pred_check
      %p126 = pneg %p125
    $region67: #{tpu_custom_call.1} parent=1 // pred_check_branch
      %128 = sbr.rel (%p126) target = $region69
    $region68: #{tpu_custom_call.1} parent=1 // pred_region
      %v129 = vld [vmem:[#allocation6] sm:$0xff]
      %130 = vst [vmem:[#allocation2] sm:$0xff] %v129
    $region69: #{tpu_custom_call.1} parent=1 // pred_fallthru
      _
    %v131 = vld [vmem:[#allocation2] sm:$0xff]
    %v132 = vpack.c.bf16 %v131, %v131
    %v133 = vld [vmem:[#allocation3] sm:$0xf]
    %v134 = vld [vmem:[#allocation8] sm:$0xf]
    %v135 = vld [vmem:[#allocation8 + $0x4] sm:$0xf]
    %v136 = vld [vmem:[#allocation8 + $0x8] sm:$0xf]
    %v137 = vld [vmem:[#allocation8 + $0xc] sm:$0xf]
    %v138 = vld [vmem:[#allocation8 + $0x10] sm:$0xf]
    %v139 = vld [vmem:[#allocation8 + $0x14] sm:$0xf]
    %v140 = vld [vmem:[#allocation8 + $0x18] sm:$0xf]
    %v141 = vld [vmem:[#allocation8 + $0x1c] sm:$0xf]
    %v142 = vld [vmem:[#allocation8 + $0x20] sm:$0xf]
    %v143 = vld [vmem:[#allocation8 + $0x24] sm:$0xf]
    %v144 = vld [vmem:[#allocation8 + $0x28] sm:$0xf]
    %v145 = vld [vmem:[#allocation8 + $0x2c] sm:$0xf]
    %v146 = vld [vmem:[#allocation8 + $0x30] sm:$0xf]
    %v147 = vld [vmem:[#allocation8 + $0x34] sm:$0xf]
    %v148 = vld [vmem:[#allocation8 + $0x38] sm:$0xf]
    %v149 = vld [vmem:[#allocation8 + $0x3c] sm:$0xf]
    %v150 = vld [vmem:[#allocation9] sm:$0xf]
    %v151 = vld [vmem:[#allocation9 + $0x4] sm:$0xf]
    %v152 = vld [vmem:[#allocation9 + $0x8] sm:$0xf]
    %v153 = vld [vmem:[#allocation9 + $0xc] sm:$0xf]
    %v154 = vld [vmem:[#allocation9 + $0x10] sm:$0xf]
    %v155 = vld [vmem:[#allocation9 + $0x14] sm:$0xf]
    %v156 = vld [vmem:[#allocation9 + $0x18] sm:$0xf]
    %v157 = vld [vmem:[#allocation9 + $0x1c] sm:$0xf]
    %v158 = vld [vmem:[#allocation9 + $0x20] sm:$0xf]
    %v159 = vld [vmem:[#allocation9 + $0x24] sm:$0xf]
    %v160 = vld [vmem:[#allocation9 + $0x28] sm:$0xf]
    %v161 = vld [vmem:[#allocation9 + $0x2c] sm:$0xf]
    %v162 = vld [vmem:[#allocation9 + $0x30] sm:$0xf]
    %v163 = vld [vmem:[#allocation9 + $0x34] sm:$0xf]
    %v164 = vld [vmem:[#allocation9 + $0x38] sm:$0xf]
    %v165 = vld [vmem:[#allocation9 + $0x3c] sm:$0xf]
    %v182 = vunpack.c.l.b16 %v150
    %v183 = vunpack.c.l.b16 %v151
    %v184 = vunpack.c.l.b16 %v152
    %v185 = vunpack.c.l.b16 %v153
    %v186 = vunpack.c.l.b16 %v154
    %v187 = vunpack.c.l.b16 %v155
    %v188 = vunpack.c.l.b16 %v156
    %v189 = vunpack.c.l.b16 %v157
    %v190 = vunpack.c.l.b16 %v158
    %v191 = vunpack.c.l.b16 %v159
    %v192 = vunpack.c.l.b16 %v160
    %v193 = vunpack.c.l.b16 %v161
    %v194 = vunpack.c.l.b16 %v162
    %v195 = vunpack.c.l.b16 %v163
    %v196 = vunpack.c.l.b16 %v164
    %v197 = vunpack.c.l.b16 %v165
    %v198 = vpack.c.b16 %v183, %v182
    %v199 = vpack.c.b16 %v185, %v184
    %v200 = vpack.c.b16 %v187, %v186
    %v201 = vpack.c.b16 %v189, %v188
    %v202 = vpack.c.b16 %v191, %v190
    %v203 = vpack.c.b16 %v193, %v192
    %v204 = vpack.c.b16 %v195, %v194
    %v205 = vpack.c.b16 %v197, %v196
    %214 = vmatprep.subr.bf16.mxu0 0
    %215 = vmatpush1.bf16.msra.mxu0 %v198
    %216 = vmatprep.subr.bf16.mxu0 0
    %217 = vmatpush1.bf16.msra.mxu0 %v199
    %218 = vmatprep.subr.bf16.mxu0 0
    %219 = vmatpush1.bf16.msra.mxu0 %v200
    %220 = vmatprep.subr.bf16.mxu0 0
    %221 = vmatpush1.bf16.msra.mxu0 %v201
    %222 = vmatprep.subr.bf16.mxu0 0
    %223 = vmatpush1.bf16.msra.mxu0 %v202
    %224 = vmatprep.subr.bf16.mxu0 0
    %225 = vmatpush1.bf16.msra.mxu0 %v203
    %226 = vmatprep.subr.bf16.mxu0 0
    %227 = vmatpush1.bf16.msra.mxu0 %v204
    %228 = vmatprep.subr.bf16.mxu0 0
    %229 = vmatpush1.bf16.msra.mxu0 %v205
    %230 = vmatprep.subr.bf16.mxu0 0
    %231 = vmatpush1.bf16.msra.mxu0 0
    %232 = vmatprep.subr.bf16.mxu0 0
    %233 = vmatpush1.bf16.msra.mxu0 0
    %234 = vmatprep.subr.bf16.mxu0 0
    %235 = vmatpush1.bf16.msra.mxu0 0
    %236 = vmatprep.subr.bf16.mxu0 0
    %237 = vmatpush1.bf16.msra.mxu0 0
    %238 = vmatprep.subr.bf16.mxu0 0
    %239 = vmatpush1.bf16.msra.mxu0 0
    %240 = vmatprep.subr.bf16.mxu0 0
    %241 = vmatpush1.bf16.msra.mxu0 0
    %242 = vmatprep.subr.bf16.mxu0 0
    %243 = vmatpush1.bf16.msra.mxu0 0
    %244 = vmatprep.subr.bf16.mxu0 0
    %245 = vmatpush1.bf16.msra.mxu0 0
    %246 = vmatprep.mubr.bf16.mxu0 0
    %247 = vmatmul.mubr.bf16.gmra.mrb[0].mxu0 %v132
    %v248 = vpop.f32.mrb[0].mxu0
    %v249 = vadd.f32 0.0, %v248
    %v250 = vpop.f32.mrb[0].mxu0
    %v251 = vpop.f32.mrb[0].mxu0
    %v252 = vpop.f32.mrb[0].mxu0
    %253 = vdwg.mxu0
    %v270 = vunpack.c.l.b16 %v134
    %v271 = vunpack.c.l.b16 %v135
    %v272 = vunpack.c.l.b16 %v136
    %v273 = vunpack.c.l.b16 %v137
    %v274 = vunpack.c.l.b16 %v138
    %v275 = vunpack.c.l.b16 %v139
    %v276 = vunpack.c.l.b16 %v140
    %v277 = vunpack.c.l.b16 %v141
    %v278 = vunpack.c.l.b16 %v142
    %v279 = vunpack.c.l.b16 %v143
    %v280 = vunpack.c.l.b16 %v144
    %v281 = vunpack.c.l.b16 %v145
    %v282 = vunpack.c.l.b16 %v146
    %v283 = vunpack.c.l.b16 %v147
    %v284 = vunpack.c.l.b16 %v148
    %v285 = vunpack.c.l.b16 %v149
    %v286 = vpack.c.b16 %v271, %v270
    %v287 = vpack.c.b16 %v273, %v272
    %v288 = vpack.c.b16 %v275, %v274
    %v289 = vpack.c.b16 %v277, %v276
    %v290 = vpack.c.b16 %v279, %v278
    %v291 = vpack.c.b16 %v281, %v280
    %v292 = vpack.c.b16 %v283, %v282
    %v293 = vpack.c.b16 %v285, %v284
    %302 = vmatprep.subr.bf16.mxu0 0
    %303 = vmatpush1.bf16.msra.mxu0 %v286
    %304 = vmatprep.subr.bf16.mxu0 0
    %305 = vmatpush1.bf16.msra.mxu0 %v287
    %306 = vmatprep.subr.bf16.mxu0 0
    %307 = vmatpush1.bf16.msra.mxu0 %v288
    %308 = vmatprep.subr.bf16.mxu0 0
    %309 = vmatpush1.bf16.msra.mxu0 %v289
    %310 = vmatprep.subr.bf16.mxu0 0
    %311 = vmatpush1.bf16.msra.mxu0 %v290
    %312 = vmatprep.subr.bf16.mxu0 0
    %313 = vmatpush1.bf16.msra.mxu0 %v291
    %314 = vmatprep.subr.bf16.mxu0 0
    %315 = vmatpush1.bf16.msra.mxu0 %v292
    %316 = vmatprep.subr.bf16.mxu0 0
    %317 = vmatpush1.bf16.msra.mxu0 %v293
    %318 = vmatprep.subr.bf16.mxu0 0
    %319 = vmatpush1.bf16.msra.mxu0 0
    %320 = vmatprep.subr.bf16.mxu0 0
    %321 = vmatpush1.bf16.msra.mxu0 0
    %322 = vmatprep.subr.bf16.mxu0 0
    %323 = vmatpush1.bf16.msra.mxu0 0
    %324 = vmatprep.subr.bf16.mxu0 0
    %325 = vmatpush1.bf16.msra.mxu0 0
    %326 = vmatprep.subr.bf16.mxu0 0
    %327 = vmatpush1.bf16.msra.mxu0 0
    %328 = vmatprep.subr.bf16.mxu0 0
    %329 = vmatpush1.bf16.msra.mxu0 0
    %330 = vmatprep.subr.bf16.mxu0 0
    %331 = vmatpush1.bf16.msra.mxu0 0
    %332 = vmatprep.subr.bf16.mxu0 0
    %333 = vmatpush1.bf16.msra.mxu0 0
    %334 = vmatprep.mubr.bf16.mxu0 0
    %335 = vmatmul.mubr.bf16.gmra.mrb[0].mxu0 %v133
    %v336 = vpop.f32.mrb[0].mxu0
    %v337 = vadd.f32 %v249, %v336
    %v338 = vpop.f32.mrb[0].mxu0
    %v339 = vpop.f32.mrb[0].mxu0
    %v340 = vpop.f32.mrb[0].mxu0
    %341 = vdwg.mxu0
    %v342 = vld [vmem:[%s7] sm:$0x1]
    %v344 = vlaneseq
    %v345 = vshrl.u32 %v344, 7
    %v346 = vsub.s32 0, %v345
    %v347 = vrot.slane %v342, %v346
    %v349 = vadd.f32 %v337, %v347
    %v350 = vxor.u32 %v349, 2147483648
    %v351 = vmul.f32 %v350, 1.442695
    %v352 = vpow.pop %v351
    %v353 = vadd.f32 %v352, 1.0
    %v354 = vrcp.pop %v353
    %v355 = vmul.f32 1.0, %v354
    %v356 = vmul.f32 %v355, %v131
    %v357 = vpack.c.bf16 %v356, %v356
    %v358 = vld [vmem:[#allocation11] sm:$0xff]
    %v359 = vld [vmem:[#allocation11 + $0x8] sm:$0xff]
    %v360 = vld [vmem:[#allocation11 + $0x10] sm:$0xff]
    %v361 = vld [vmem:[#allocation11 + $0x18] sm:$0xff]
    %v362 = vld [vmem:[#allocation11 + $0x20] sm:$0xff]
    %v363 = vld [vmem:[#allocation11 + $0x28] sm:$0xff]
    %v364 = vld [vmem:[#allocation11 + $0x30] sm:$0xff]
    %v365 = vld [vmem:[#allocation11 + $0x38] sm:$0xff]
    %v366 = vld [vmem:[#allocation11 + $0x40] sm:$0xff]
    %v367 = vld [vmem:[#allocation11 + $0x48] sm:$0xff]
    %v368 = vld [vmem:[#allocation11 + $0x50] sm:$0xff]
    %v369 = vld [vmem:[#allocation11 + $0x58] sm:$0xff]
    %v370 = vld [vmem:[#allocation11 + $0x60] sm:$0xff]
    %v371 = vld [vmem:[#allocation11 + $0x68] sm:$0xff]
    %v372 = vld [vmem:[#allocation11 + $0x70] sm:$0xff]
    %v373 = vld [vmem:[#allocation11 + $0x78] sm:$0xff]
    %v374 = vld [vmem:[%s8] sm:$0x3]
    %v376 = vlaneseq
    %v377 = vshrl.u32 %v376, 7
    %v378 = vsub.s32 0, %v377
    %v379 = vrot.slane %v374, %v378
    %v380 = vlaneseq
    %v381 = vshrl.u32 %v380, 7
    %v382 = vsub.s32 1, %v381
    %v383 = vrot.slane %v374, %v382
    %v402 = vunpack.c.l.b16 %v358
    %v403 = vunpack.c.h.b16 %v358
    %v404 = vunpack.c.l.b16 %v359
    %v405 = vunpack.c.h.b16 %v359
    %v406 = vunpack.c.l.b16 %v360
    %v407 = vunpack.c.h.b16 %v360
    %v408 = vunpack.c.l.b16 %v361
    %v409 = vunpack.c.h.b16 %v361
    %v410 = vunpack.c.l.b16 %v362
    %v411 = vunpack.c.h.b16 %v362
    %v412 = vunpack.c.l.b16 %v363
    %v413 = vunpack.c.h.b16 %v363
    %v414 = vunpack.c.l.b16 %v364
    %v415 = vunpack.c.h.b16 %v364
    %v416 = vunpack.c.l.b16 %v365
    %v417 = vunpack.c.h.b16 %v365
    %v418 = vunpack.c.l.b16 %v366
    %v419 = vunpack.c.h.b16 %v366
    %v420 = vunpack.c.l.b16 %v367
    %v421 = vunpack.c.h.b16 %v367
    %v422 = vunpack.c.l.b16 %v368
    %v423 = vunpack.c.h.b16 %v368
    %v424 = vunpack.c.l.b16 %v369
    %v425 = vunpack.c.h.b16 %v369
    %v426 = vunpack.c.l.b16 %v370
    %v427 = vunpack.c.h.b16 %v370
    %v428 = vunpack.c.l.b16 %v371
    %v429 = vunpack.c.h.b16 %v371
    %v430 = vunpack.c.l.b16 %v372
    %v431 = vunpack.c.h.b16 %v372
    %v432 = vunpack.c.l.b16 %v373
    %v433 = vunpack.c.h.b16 %v373
    %v434 = vpack.c.b16 %v404, %v402
    %v435 = vpack.c.b16 %v405, %v403
    %v436 = vpack.c.b16 %v408, %v406
    %v437 = vpack.c.b16 %v409, %v407
    %v438 = vpack.c.b16 %v412, %v410
    %v439 = vpack.c.b16 %v413, %v411
    %v440 = vpack.c.b16 %v416, %v414
    %v441 = vpack.c.b16 %v417, %v415
    %v442 = vpack.c.b16 %v420, %v418
    %v443 = vpack.c.b16 %v421, %v419
    %v444 = vpack.c.b16 %v424, %v422
    %v445 = vpack.c.b16 %v425, %v423
    %v446 = vpack.c.b16 %v428, %v426
    %v447 = vpack.c.b16 %v429, %v427
    %v448 = vpack.c.b16 %v432, %v430
    %v449 = vpack.c.b16 %v433, %v431
    %466 = vmatprep.subr.bf16.mxu0 %v435
    %467 = vmatpush1.bf16.msra.mxu0 %v434
    %468 = vmatprep.subr.bf16.mxu0 %v437
    %469 = vmatpush1.bf16.msra.mxu0 %v436
    %470 = vmatprep.subr.bf16.mxu0 %v439
    %471 = vmatpush1.bf16.msra.mxu0 %v438
    %472 = vmatprep.subr.bf16.mxu0 %v441
    %473 = vmatpush1.bf16.msra.mxu0 %v440
    %474 = vmatprep.subr.bf16.mxu0 %v443
    %475 = vmatpush1.bf16.msra.mxu0 %v442
    %476 = vmatprep.subr.bf16.mxu0 %v445
    %477 = vmatpush1.bf16.msra.mxu0 %v444
    %478 = vmatprep.subr.bf16.mxu0 %v447
    %479 = vmatpush1.bf16.msra.mxu0 %v446
    %480 = vmatprep.subr.bf16.mxu0 %v449
    %481 = vmatpush1.bf16.msra.mxu0 %v448
    %482 = vmatprep.subr.bf16.mxu0 0
    %483 = vmatpush1.bf16.msra.mxu0 0
    %484 = vmatprep.subr.bf16.mxu0 0
    %485 = vmatpush1.bf16.msra.mxu0 0
    %486 = vmatprep.subr.bf16.mxu0 0
    %487 = vmatpush1.bf16.msra.mxu0 0
    %488 = vmatprep.subr.bf16.mxu0 0
    %489 = vmatpush1.bf16.msra.mxu0 0
    %490 = vmatprep.subr.bf16.mxu0 0
    %491 = vmatpush1.bf16.msra.mxu0 0
    %492 = vmatprep.subr.bf16.mxu0 0
    %493 = vmatpush1.bf16.msra.mxu0 0
    %494 = vmatprep.subr.bf16.mxu0 0
    %495 = vmatpush1.bf16.msra.mxu0 0
    %496 = vmatprep.subr.bf16.mxu0 0
    %497 = vmatpush1.bf16.msra.mxu0 0
    %498 = vmatprep.mubr.bf16.mxu0 0
    %499 = vmatmul.mubr.bf16.gmra.mrb[0].mxu0 %v133
    %v500 = vpop.f32.mrb[0].mxu0
    %v501 = vadd.f32 %v379, %v500
    %v502 = vpop.f32.mrb[0].mxu0
    %v503 = vadd.f32 %v383, %v502
    %v504 = vpop.f32.mrb[0].mxu0
    %v505 = vpop.f32.mrb[0].mxu0
    %506 = vdwg.mxu0
    %v507 = vld [vmem:[#allocation12] sm:$0xf]
    %v508 = vld [vmem:[#allocation12 + $0x4] sm:$0xf]
    %v509 = vld [vmem:[#allocation12 + $0x8] sm:$0xf]
    %v510 = vld [vmem:[#allocation12 + $0xc] sm:$0xf]
    %v511 = vld [vmem:[#allocation12 + $0x10] sm:$0xf]
    %v512 = vld [vmem:[#allocation12 + $0x14] sm:$0xf]
    %v513 = vld [vmem:[#allocation12 + $0x18] sm:$0xf]
    %v514 = vld [vmem:[#allocation12 + $0x1c] sm:$0xf]
    %v515 = vld [vmem:[#allocation12 + $0x20] sm:$0xf]
    %v516 = vld [vmem:[#allocation12 + $0x24] sm:$0xf]
    %v517 = vld [vmem:[#allocation12 + $0x28] sm:$0xf]
    %v518 = vld [vmem:[#allocation12 + $0x2c] sm:$0xf]
    %v519 = vld [vmem:[#allocation12 + $0x30] sm:$0xf]
    %v520 = vld [vmem:[#allocation12 + $0x34] sm:$0xf]
    %v521 = vld [vmem:[#allocation12 + $0x38] sm:$0xf]
    %v522 = vld [vmem:[#allocation12 + $0x3c] sm:$0xf]
    %v539 = vunpack.c.l.b16 %v507
    %v540 = vunpack.c.l.b16 %v508
    %v541 = vunpack.c.l.b16 %v509
    %v542 = vunpack.c.l.b16 %v510
    %v543 = vunpack.c.l.b16 %v511
    %v544 = vunpack.c.l.b16 %v512
    %v545 = vunpack.c.l.b16 %v513
    %v546 = vunpack.c.l.b16 %v514
    %v547 = vunpack.c.l.b16 %v515
    %v548 = vunpack.c.l.b16 %v516
    %v549 = vunpack.c.l.b16 %v517
    %v550 = vunpack.c.l.b16 %v518
    %v551 = vunpack.c.l.b16 %v519
    %v552 = vunpack.c.l.b16 %v520
    %v553 = vunpack.c.l.b16 %v521
    %v554 = vunpack.c.l.b16 %v522
    %v555 = vpack.c.b16 %v540, %v539
    %v556 = vpack.c.b16 %v542, %v541
    %v557 = vpack.c.b16 %v544, %v543
    %v558 = vpack.c.b16 %v546, %v545
    %v559 = vpack.c.b16 %v548, %v547
    %v560 = vpack.c.b16 %v550, %v549
    %v561 = vpack.c.b16 %v552, %v551
    %v562 = vpack.c.b16 %v554, %v553
    %571 = vmatprep.subr.bf16.mxu0 0
    %572 = vmatpush1.bf16.msra.mxu0 %v555
    %573 = vmatprep.subr.bf16.mxu0 0
    %574 = vmatpush1.bf16.msra.mxu0 %v556
    %575 = vmatprep.subr.bf16.mxu0 0
    %576 = vmatpush1.bf16.msra.mxu0 %v557
    %577 = vmatprep.subr.bf16.mxu0 0
    %578 = vmatpush1.bf16.msra.mxu0 %v558
    %579 = vmatprep.subr.bf16.mxu0 0
    %580 = vmatpush1.bf16.msra.mxu0 %v559
    %581 = vmatprep.subr.bf16.mxu0 0
    %582 = vmatpush1.bf16.msra.mxu0 %v560
    %583 = vmatprep.subr.bf16.mxu0 0
    %584 = vmatpush1.bf16.msra.mxu0 %v561
    %585 = vmatprep.subr.bf16.mxu0 0
    %586 = vmatpush1.bf16.msra.mxu0 %v562
    %587 = vmatprep.subr.bf16.mxu0 0
    %588 = vmatpush1.bf16.msra.mxu0 0
    %589 = vmatprep.subr.bf16.mxu0 0
    %590 = vmatpush1.bf16.msra.mxu0 0
    %591 = vmatprep.subr.bf16.mxu0 0
    %592 = vmatpush1.bf16.msra.mxu0 0
    %593 = vmatprep.subr.bf16.mxu0 0
    %594 = vmatpush1.bf16.msra.mxu0 0
    %595 = vmatprep.subr.bf16.mxu0 0
    %596 = vmatpush1.bf16.msra.mxu0 0
    %597 = vmatprep.subr.bf16.mxu0 0
    %598 = vmatpush1.bf16.msra.mxu0 0
    %599 = vmatprep.subr.bf16.mxu0 0
    %600 = vmatpush1.bf16.msra.mxu0 0
    %601 = vmatprep.subr.bf16.mxu0 0
    %602 = vmatpush1.bf16.msra.mxu0 0
    %603 = vmatprep.mubr.bf16.mxu0 0
    %604 = vmatmul.mubr.bf16.gmra.mrb[0].mxu0 %v132
    %v605 = vpop.f32.mrb[0].mxu0
    %v606 = vadd.f32 0.0, %v605
    %v607 = vpop.f32.mrb[0].mxu0
    %v608 = vpop.f32.mrb[0].mxu0
    %v609 = vpop.f32.mrb[0].mxu0
    %610 = vdwg.mxu0
    %v611 = vadd.f32 %v501, %v606
    %v612 = vxor.u32 %v611, 2147483648
    %v613 = vmul.f32 %v612, 1.442695
    %v614 = vpow.pop %v613
    %v615 = vadd.f32 %v614, 1.0
    %v616 = vrcp.pop %v615
    %v617 = vmul.f32 1.0, %v616
    %v618 = vld [vmem:[#allocation14] sm:$0xf]
    %v619 = vld [vmem:[#allocation14 + $0x4] sm:$0xf]
    %v620 = vld [vmem:[#allocation14 + $0x8] sm:$0xf]
    %v621 = vld [vmem:[#allocation14 + $0xc] sm:$0xf]
    %v622 = vld [vmem:[#allocation14 + $0x10] sm:$0xf]
    %v623 = vld [vmem:[#allocation14 + $0x14] sm:$0xf]
    %v624 = vld [vmem:[#allocation14 + $0x18] sm:$0xf]
    %v625 = vld [vmem:[#allocation14 + $0x1c] sm:$0xf]
    %v626 = vld [vmem:[#allocation14 + $0x20] sm:$0xf]
    %v627 = vld [vmem:[#allocation14 + $0x24] sm:$0xf]
    %v628 = vld [vmem:[#allocation14 + $0x28] sm:$0xf]
    %v629 = vld [vmem:[#allocation14 + $0x2c] sm:$0xf]
    %v630 = vld [vmem:[#allocation14 + $0x30] sm:$0xf]
    %v631 = vld [vmem:[#allocation14 + $0x34] sm:$0xf]
    %v632 = vld [vmem:[#allocation14 + $0x38] sm:$0xf]
    %v633 = vld [vmem:[#allocation14 + $0x3c] sm:$0xf]
    %v650 = vunpack.c.l.b16 %v618
    %v651 = vunpack.c.l.b16 %v619
    %v652 = vunpack.c.l.b16 %v620
    %v653 = vunpack.c.l.b16 %v621
    %v654 = vunpack.c.l.b16 %v622
    %v655 = vunpack.c.l.b16 %v623
    %v656 = vunpack.c.l.b16 %v624
    %v657 = vunpack.c.l.b16 %v625
    %v658 = vunpack.c.l.b16 %v626
    %v659 = vunpack.c.l.b16 %v627
    %v660 = vunpack.c.l.b16 %v628
    %v661 = vunpack.c.l.b16 %v629
    %v662 = vunpack.c.l.b16 %v630
    %v663 = vunpack.c.l.b16 %v631
    %v664 = vunpack.c.l.b16 %v632
    %v665 = vunpack.c.l.b16 %v633
    %v666 = vpack.c.b16 %v651, %v650
    %v667 = vpack.c.b16 %v653, %v652
    %v668 = vpack.c.b16 %v655, %v654
    %v669 = vpack.c.b16 %v657, %v656
    %v670 = vpack.c.b16 %v659, %v658
    %v671 = vpack.c.b16 %v661, %v660
    %v672 = vpack.c.b16 %v663, %v662
    %v673 = vpack.c.b16 %v665, %v664
    %682 = vmatprep.subr.bf16.mxu0 0
    %683 = vmatpush1.bf16.msra.mxu0 %v666
    %684 = vmatprep.subr.bf16.mxu0 0
    %685 = vmatpush1.bf16.msra.mxu0 %v667
    %686 = vmatprep.subr.bf16.mxu0 0
    %687 = vmatpush1.bf16.msra.mxu0 %v668
    %688 = vmatprep.subr.bf16.mxu0 0
    %689 = vmatpush1.bf16.msra.mxu0 %v669
    %690 = vmatprep.subr.bf16.mxu0 0
    %691 = vmatpush1.bf16.msra.mxu0 %v670
    %692 = vmatprep.subr.bf16.mxu0 0
    %693 = vmatpush1.bf16.msra.mxu0 %v671
    %694 = vmatprep.subr.bf16.mxu0 0
    %695 = vmatpush1.bf16.msra.mxu0 %v672
    %696 = vmatprep.subr.bf16.mxu0 0
    %697 = vmatpush1.bf16.msra.mxu0 %v673
    %698 = vmatprep.subr.bf16.mxu0 0
    %699 = vmatpush1.bf16.msra.mxu0 0
    %700 = vmatprep.subr.bf16.mxu0 0
    %701 = vmatpush1.bf16.msra.mxu0 0
    %702 = vmatprep.subr.bf16.mxu0 0
    %703 = vmatpush1.bf16.msra.mxu0 0
    %704 = vmatprep.subr.bf16.mxu0 0
    %705 = vmatpush1.bf16.msra.mxu0 0
    %706 = vmatprep.subr.bf16.mxu0 0
    %707 = vmatpush1.bf16.msra.mxu0 0
    %708 = vmatprep.subr.bf16.mxu0 0
    %709 = vmatpush1.bf16.msra.mxu0 0
    %710 = vmatprep.subr.bf16.mxu0 0
    %711 = vmatpush1.bf16.msra.mxu0 0
    %712 = vmatprep.subr.bf16.mxu0 0
    %713 = vmatpush1.bf16.msra.mxu0 0
    %714 = vmatprep.mubr.bf16.mxu0 0
    %715 = vmatmul.mubr.bf16.gmra.mrb[0].mxu0 %v357
    %v716 = vpop.f32.mrb[0].mxu0
    %v717 = vadd.f32 0.0, %v716
    %v718 = vpop.f32.mrb[0].mxu0
    %v719 = vpop.f32.mrb[0].mxu0
    %v720 = vpop.f32.mrb[0].mxu0
    %721 = vdwg.mxu0
    %v722 = vadd.f32 %v503, %v717
    %v723 = vtanh.pop %v722
    %v724 = vsub.f32 %v131, %v723
    %v725 = vmul.f32 %v617, %v724
    %v726 = vadd.f32 %v723, %v725
    %727 = vst [vmem:[#allocation2] sm:$0xff] %v726
    %728 = vst [vmem:[#allocation15] sm:$0xff] %v726
    // Predicated region
    $region70: #{tpu_custom_call.1} parent=1 // pred_check
      _
    $region71: #{tpu_custom_call.1} parent=1 // pred_check_branch
      %730 = sbr.rel (0) target = $region73
    $region72: #{tpu_custom_call.1} parent=1 // pred_region
      %s732 = ssub.s32 128, 128
      %733 = vsyncadd [#allocation5], %s732
      %s735 = sshll.u32 [#allocation15], 4
      %s736 = int_to_ptr.vmem [resolvable:$true] %s735
      %738 = dma.vmem_to_hbm [thread:$0]  %s736, 128, %s9, [#allocation5]
    $region73: #{tpu_custom_call.1} parent=1 // pred_fallthru
      _
    // Predicated region
    $region74: #{tpu_custom_call.1} parent=1 // pred_check
      _
    $region75: #{tpu_custom_call.1} parent=1 // pred_check_branch
      %740 = sbr.rel (0) target = $region77
    $region76: #{tpu_custom_call.1} parent=1 // pred_region
      %741 = dma.done [#allocation5], 128
    $region77: #{tpu_custom_call.1} parent=1 // pred_fallthru
      _
    %742 = vsyncpa [#allocation4], 1
    %743 = vsyncpa [#allocation7], 1
    %744 = vsyncpa [#allocation10], 1
    %745 = vsyncpa [#allocation13], 1
    %746 = vsyncpa [#allocation5], 1

</llo_original>
